<compile_context>
chip_gen: v5e
topology: v5e:2x2
jax: 0.10.0
libtpu: 0.0.40
codegen_flags: <defaults>
</compile_context>

<pallas_src>
import functools

import jax
import jax.numpy as jnp
from jax import lax
from jax.experimental import pallas as pl
from jax.experimental.pallas import tpu as pltpu

HALO_ROWS = 8  # 8-row halo granule; 8*W lanes must be a multiple of 128


def _shift_flat(f, s):
    """S[:, i] = f[:, i + s], zero-filled where i + s falls outside [0, L)."""
    if s == 0:
        return f
    c, l = f.shape
    z = jnp.zeros((c, abs(s)), f.dtype)
    if s > 0:
        return jnp.concatenate([f[:, s:], z], axis=1)
    return jnp.concatenate([z, f[:, :l + s]], axis=1)


def _resblock_kernel(xm_ref, xt_ref, xb_ref, w1_ref, w2_ref,
                     s1_ref, b1_ref, s2_ref, b2_ref, o_ref,
                     *, W, TH, use_bf16):
    # xm_ref : (1, C, TH*W)   current row tile, lane-dense (also the residual)
    # xt_ref : (1, C, 8*W)    8-row granule just above the tile (last 2 rows used)
    # xb_ref : (1, C, 8*W)    8-row granule just below the tile (first 2 rows used)
    # w*_ref : (9, C, C)      per-tap weights, tap index = ky*3 + kx, (C_out, C_in)
    # s*/b*  : (C, 1)         folded BN scale / bias (f32)
    # o_ref  : (1, C, TH*W)   output slab (lane-dense, unmasked vst)
    C = xm_ref.shape[1]
    P = TH + 4                      # canvas rows: image rows [t-2, t+TH+1]
    L = P * W
    f32 = jnp.float32
    cdt = jnp.bfloat16 if use_bf16 else f32

    j = pl.program_id(1)
    nt = pl.num_programs(1)
    top_ok = (j > 0).astype(f32)
    bot_ok = (j < nt - 1).astype(f32)

    # ---- canvas: rows [t-2, t+TH+1] flattened lane-dense, zeros outside image ----
    mid = xm_ref[0].astype(f32)                                         # (C, TH*W)
    top2 = xt_ref[0, :, (HALO_ROWS - 2) * W:].astype(f32) * top_ok      # (C, 2W)
    bot2 = xb_ref[0, :, :2 * W].astype(f32) * bot_ok                    # (C, 2W)
    xf = jnp.concatenate([top2, mid, bot2], axis=1)                     # (C, L)

    # ---- flat-index helpers: column / canvas-row ids and validity masks ----
    col = lax.broadcasted_iota(jnp.int32, (1, P, W), 2).reshape(1, L)
    row = lax.broadcasted_iota(jnp.int32, (1, P, W), 1).reshape(1, L)
    not_c0 = (col != 0).astype(cdt)          # mask for dx = -1 taps (SAME col pad)
    not_cL = (col != W - 1).astype(cdt)      # mask for dx = +1 taps
    # valid hidden rows: inside [1, P-2] and inside the image
    row_ok = jnp.logical_and(
        jnp.logical_and(row >= 1, row <= P - 2),
        jnp.logical_and(jnp.logical_or(j > 0, row >= 2),
                        jnp.logical_or(j < nt - 1, row <= P - 3))).astype(f32)

    def conv3x3(fc, w_ref):
        # fc: (C, L) in compute dtype; returns f32 (C, L), 9 per-tap matmuls.
        acc = jnp.zeros((C, L), f32)
        for ky in range(3):
            for kx in range(3):
                dy, dx = ky - 1, kx - 1
                v = _shift_flat(fc, dy * W + dx)
                if dx == -1:
                    v = v * not_c0
                elif dx == 1:
                    v = v * not_cL
                acc = acc + jnp.dot(w_ref[ky * 3 + kx], v,
                                    preferred_element_type=f32)
        return acc

    # ---- conv1 -> bn1 -> relu (zero rows outside the valid hidden range) ----
    h = conv3x3(xf.astype(cdt), w1_ref)
    h = jnp.maximum(h * s1_ref[...] + b1_ref[...], 0.0) * row_ok

    # ---- conv2 -> bn2 ----
    o = conv3x3(h.astype(cdt), w2_ref)
    o = o * s2_ref[...] + b2_ref[...]

    # ---- extract the TH output rows, add residual, relu ----
    out = jnp.maximum(o[:, 2 * W:2 * W + TH * W] + mid, 0.0)
    o_ref[...] = out.reshape(1, C, TH * W).astype(o_ref.dtype)


def _vmem_cap_bytes():
    # Per-generation scoped-VMEM cap: v7x has 64 MiB/TC, v5e/v6e have 128 MiB.
    try:
        kind = jax.devices()[0].device_kind.lower()
    except Exception:
        kind = ""
    if "v5" in kind or "v6" in kind:
        return 96 * 2**20
    return 48 * 2**20               # conservative default (v7x / unknown)


def _pick_row_tile(H, W, C, N, budget_bytes):
    """Largest row tile (multiple of 8, dividing H) that fits the VMEM budget."""
    cands = [t for t in range(HALO_ROWS, H + 1, HALO_ROWS) if H % t == 0] or [H]

    def footprint(t):
        L = (t + 4) * W
        blocks = 2 * 4 * (2 * C * t * W + 2 * C * HALO_ROWS * W
                          + 2 * 9 * C * C + 4 * C)    # double-buffered pipeline blocks
        temps = 4 * 12 * C * L                        # canvas + taps + acc + h (f32)
        return blocks + temps

    ok = [t for t in cands if footprint(t) <= budget_bytes] or [cands[0]]
    th = max(ok)
    # keep >=2 independent parallel blocks for 2-TensorCore chips if batch can't
    if N < 2 and H // th < 2:
        two = [t for t in ok if H // t >= 2]
        if two:
            th = max(two)
    return th


@functools.partial(jax.jit, static_argnames=("row_tile",))
def residual_block_nchw(x, w1_hwio, w2_hwio, scale1, bias1, scale2, bias2,
                        *, row_tile=None):
    """x: (N, C, H, W). Weights HWIO (3,3,C,C). Returns (N, C, H, W)."""
    N, C, H, W = x.shape
    assert H % HALO_ROWS == 0, "H must be a multiple of 8"
    assert (HALO_ROWS * W) % 128 == 0, "W must be a multiple of 16"
    # TODO(synk): support W not a multiple of 16 (needs a padded flat layout).

    cap = _vmem_cap_bytes()
    TH = row_tile if row_tile is not None else _pick_row_tile(H, W, C, N, cap // 2)
    assert H % TH == 0 and TH % HALO_ROWS == 0
    n_tiles = H // TH
    gh = TH // HALO_ROWS
    nhb = H // HALO_ROWS

    use_bf16 = C >= 32                      # bf16 MXU operands only when C fills the MXU
    wdt = jnp.bfloat16 if use_bf16 else jnp.float32

    # per-tap weights: (9, C_out, C_in), tap index = ky*3 + kx
    w1t = jnp.transpose(w1_hwio, (0, 1, 3, 2)).reshape(9, C, C).astype(wdt)
    w2t = jnp.transpose(w2_hwio, (0, 1, 3, 2)).reshape(9, C, C).astype(wdt)
    s1 = scale1.reshape(C, 1).astype(jnp.float32)
    b1 = bias1.reshape(C, 1).astype(jnp.float32)
    s2 = scale2.reshape(C, 1).astype(jnp.float32)
    b2 = bias2.reshape(C, 1).astype(jnp.float32)

    xf = x.reshape(N, C, H * W)             # lane-dense activation layout (free)

    est = (2 * 4 * (2 * C * TH * W + 2 * C * HALO_ROWS * W + 2 * 9 * C * C + 4 * C)
           + 4 * 12 * C * (TH + 4) * W)
    vmem_limit = int(min(cap, max(32 * 2**20, 2 * est)))

    kern = functools.partial(_resblock_kernel, W=W, TH=TH, use_bf16=use_bf16)

    wspec = pl.BlockSpec((9, C, C), lambda n, j: (0, 0, 0))
    vspec = pl.BlockSpec((C, 1), lambda n, j: (0, 0))

    out_flat = pl.pallas_call(
        kern,
        out_shape=jax.ShapeDtypeStruct((N, C, H * W), x.dtype),
        grid_spec=pltpu.PrefetchScalarGridSpec(
            num_scalar_prefetch=0,
            grid=(N, n_tiles),
            in_specs=[
                # current row tile (lane-dense)
                pl.BlockSpec((1, C, TH * W), lambda n, j: (n, 0, j)),
                # 8-row halo granule above (clamped at top edge; masked in-kernel)
                pl.BlockSpec((1, C, HALO_ROWS * W),
                             lambda n, j: (n, 0, jnp.maximum(j * gh - 1, 0))),
                # 8-row halo granule below (clamped at bottom edge; masked in-kernel)
                pl.BlockSpec((1, C, HALO_ROWS * W),
                             lambda n, j: (n, 0, jnp.minimum((j + 1) * gh, nhb - 1))),
                wspec, wspec, vspec, vspec, vspec, vspec,
            ],
            out_specs=pl.BlockSpec((1, C, TH * W), lambda n, j: (n, 0, j)),
        ),
        compiler_params=pltpu.CompilerParams(
            dimension_semantics=("parallel", "parallel"),
            vmem_limit_bytes=vmem_limit),
    )(xf, xf, xf, w1t, w2t, s1, b1, s2, b2)

    return out_flat.reshape(N, C, H, W)


def _reference_nchw(x, w1_hwio, w2_hwio, s1, b1, s2, b2):
    """Pure-JAX reference (eval-mode BN folded into scale/bias)."""
    dn = ("NCHW", "HWIO", "NCHW")
    prec = lax.Precision.HIGHEST

    def bn(t, s, b):
        return t * s[None, :, None, None] + b[None, :, None, None]

    o1 = lax.conv_general_dilated(x, w1_hwio, (1, 1), "SAME",
                                  dimension_numbers=dn, precision=prec)
    h1 = jnp.maximum(bn(o1, s1, b1), 0.0)
    o2 = lax.conv_general_dilated(h1, w2_hwio, (1, 1), "SAME",
                                  dimension_numbers=dn, precision=prec)
    return jnp.maximum(bn(o2, s2, b2) + x, 0.0)


if __name__ == "__main__":
    key = jax.random.PRNGKey(0)
    N, C, H, W = 2, 4, 16, 16          # in_channels == out_channels, stride=1
    ks = jax.random.split(key, 10)

    x = jax.random.normal(ks[0], (N, C, H, W), jnp.float32)

    # conv weights, HWIO layout (deterministic synthetic init)
    w1 = jax.random.normal(ks[1], (3, 3, C, C), jnp.float32) * 0.2
    w2 = jax.random.normal(ks[2], (3, 3, C, C), jnp.float32) * 0.2

    # BatchNorm params + running stats (eval mode), folded to scale/bias
    eps = 1e-5
    g1 = jax.random.uniform(ks[3], (C,), jnp.float32, 0.5, 1.5)
    be1 = jax.random.normal(ks[4], (C,), jnp.float32) * 0.1
    m1 = jax.random.normal(ks[5], (C,), jnp.float32) * 0.1
    v1 = jax.random.uniform(ks[6], (C,), jnp.float32, 0.5, 1.5)
    g2 = jax.random.uniform(ks[7], (C,), jnp.float32, 0.5, 1.5)
    be2 = jax.random.normal(ks[8], (C,), jnp.float32) * 0.1
    m2 = jax.random.normal(ks[9], (C,), jnp.float32) * 0.1
    v2 = jnp.ones((C,), jnp.float32)

    scale1 = g1 / jnp.sqrt(v1 + eps)
    bias1 = be1 - m1 * scale1
    scale2 = g2 / jnp.sqrt(v2 + eps)
    bias2 = be2 - m2 * scale2

    out = residual_block_nchw(x, w1, w2, scale1, bias1, scale2, bias2)
    out = jax.block_until_ready(out)

    ref = _reference_nchw(x, w1, w2, scale1, bias1, scale2, bias2)
    assert out.shape == (N, C, H, W)
    err = float(jnp.max(jnp.abs(out - ref)))
    assert jnp.allclose(out, ref, atol=2e-3, rtol=2e-3), f"mismatch: {err}"

    print("KERNEL_OK")
</pallas_src>

<mosaic_0001>
module attributes {stable_mosaic.version = 11 : i64} {
  func.func @_resblock_kernel(%arg0: i32, %arg1: i32, %arg2: memref<1x4x256xf32, #tpu.memory_space<vmem>>, %arg3: memref<1x4x128xf32, #tpu.memory_space<vmem>>, %arg4: memref<1x4x128xf32, #tpu.memory_space<vmem>>, %arg5: memref<9x4x4xf32, #tpu.memory_space<vmem>>, %arg6: memref<9x4x4xf32, #tpu.memory_space<vmem>>, %arg7: memref<4x1xf32, #tpu.memory_space<vmem>>, %arg8: memref<4x1xf32, #tpu.memory_space<vmem>>, %arg9: memref<4x1xf32, #tpu.memory_space<vmem>>, %arg10: memref<4x1xf32, #tpu.memory_space<vmem>>, %arg11: memref<1x4x256xf32, #tpu.memory_space<vmem>>) attributes {dimension_semantics = [#tpu.dimension_semantics<parallel>, #tpu.dimension_semantics<parallel>], iteration_bounds = array<i64: 2, 1>, scalar_prefetch = 0 : i64, scratch_operands = 0 : i64, tpu.core_type = #tpu.core_type<tc>, window_params = [{transform_indices = @transform_0, window_bounds = array<i64: 1, 4, 256>}, {transform_indices = @transform_1, window_bounds = array<i64: 1, 4, 128>}, {transform_indices = @transform_2, window_bounds = array<i64: 1, 4, 128>}, {pipeline_mode = #tpu.pipeline_mode<synchronous>, transform_indices = @transform_3, window_bounds = array<i64: 9, 4, 4>}, {pipeline_mode = #tpu.pipeline_mode<synchronous>, transform_indices = @transform_4, window_bounds = array<i64: 9, 4, 4>}, {pipeline_mode = #tpu.pipeline_mode<synchronous>, transform_indices = @transform_5, window_bounds = array<i64: 4, 1>}, {pipeline_mode = #tpu.pipeline_mode<synchronous>, transform_indices = @transform_6, window_bounds = array<i64: 4, 1>}, {pipeline_mode = #tpu.pipeline_mode<synchronous>, transform_indices = @transform_7, window_bounds = array<i64: 4, 1>}, {pipeline_mode = #tpu.pipeline_mode<synchronous>, transform_indices = @transform_8, window_bounds = array<i64: 4, 1>}, {transform_indices = @transform_9, window_bounds = array<i64: 1, 4, 256>}]} {
    %c0_i32 = arith.constant 0 : i32
    %0 = arith.cmpi sgt, %arg1, %c0_i32 : i32
    %1 = arith.extui %0 : i1 to i32
    %2 = arith.sitofp %1 : i32 to f32
    %c0_i32_0 = arith.constant 0 : i32
    %3 = arith.cmpi slt, %arg1, %c0_i32_0 : i32
    %4 = arith.extui %3 : i1 to i32
    %5 = arith.sitofp %4 : i32 to f32
    %c0 = arith.constant 0 : index
    %c0_1 = arith.constant 0 : index
    %c0_2 = arith.constant 0 : index
    %6 = vector.load %arg2[%c0, %c0_1, %c0_2] : memref<1x4x256xf32, #tpu.memory_space<vmem>>, vector<1x4x256xf32>
    %7 = vector.shape_cast %6 : vector<1x4x256xf32> to vector<4x256xf32>
    %c0_3 = arith.constant 0 : index
    %c0_4 = arith.constant 0 : index
    %c96 = arith.constant 96 : index
    %8 = vector.load %arg3[%c0_3, %c0_4, %c96] : memref<1x4x128xf32, #tpu.memory_space<vmem>>, vector<1x4x32xf32>
    %9 = vector.shape_cast %8 : vector<1x4x32xf32> to vector<4x32xf32>
    %10 = vector.broadcast %2 : f32 to vector<4x32xf32>
    %11 = arith.mulf %9, %10 : vector<4x32xf32>
    %c0_5 = arith.constant 0 : index
    %c0_6 = arith.constant 0 : index
    %c0_7 = arith.constant 0 : index
    %12 = vector.load %arg4[%c0_5, %c0_6, %c0_7] : memref<1x4x128xf32, #tpu.memory_space<vmem>>, vector<1x4x32xf32>
    %13 = vector.shape_cast %12 : vector<1x4x32xf32> to vector<4x32xf32>
    %14 = vector.broadcast %5 : f32 to vector<4x32xf32>
    %15 = arith.mulf %13, %14 : vector<4x32xf32>
    %16 = tpu.concatenate %11, %7, %15 in 1 : vector<4x32xf32>, vector<4x256xf32>, vector<4x32xf32> -> vector<4x320xf32>
    %17 = tpu.iota {dimensions = array<i32: 2>} : vector<1x20x16xi32>
    %18 = vector.shape_cast %17 : vector<1x20x16xi32> to vector<1x320xi32>
    %19 = tpu.iota {dimensions = array<i32: 1>} : vector<1x20x16xi32>
    %20 = vector.shape_cast %19 : vector<1x20x16xi32> to vector<1x320xi32>
    %c0_i32_8 = arith.constant 0 : i32
    %21 = vector.broadcast %c0_i32_8 : i32 to vector<1x320xi32>
    %22 = arith.cmpi ne, %18, %21 : vector<1x320xi32>
    %23 = arith.extui %22 : vector<1x320xi1> to vector<1x320xi32>
    %24 = arith.sitofp %23 : vector<1x320xi32> to vector<1x320xf32>
    %c15_i32 = arith.constant 15 : i32
    %25 = vector.broadcast %c15_i32 : i32 to vector<1x320xi32>
    %26 = arith.cmpi ne, %18, %25 : vector<1x320xi32>
    %27 = arith.extui %26 : vector<1x320xi1> to vector<1x320xi32>
    %28 = arith.sitofp %27 : vector<1x320xi32> to vector<1x320xf32>
    %c1_i32 = arith.constant 1 : i32
    %29 = vector.broadcast %c1_i32 : i32 to vector<1x320xi32>
    %30 = arith.cmpi sge, %20, %29 : vector<1x320xi32>
    %c18_i32 = arith.constant 18 : i32
    %31 = vector.broadcast %c18_i32 : i32 to vector<1x320xi32>
    %32 = arith.cmpi sle, %20, %31 : vector<1x320xi32>
    %33 = arith.andi %30, %32 : vector<1x320xi1>
    %c0_i32_9 = arith.constant 0 : i32
    %34 = arith.cmpi sgt, %arg1, %c0_i32_9 : i32
    %c2_i32 = arith.constant 2 : i32
    %35 = vector.broadcast %c2_i32 : i32 to vector<1x320xi32>
    %36 = arith.cmpi sge, %20, %35 : vector<1x320xi32>
    %37 = vector.broadcast %34 : i1 to vector<1x320xi1>
    %38 = arith.ori %37, %36 : vector<1x320xi1>
    %c0_i32_10 = arith.constant 0 : i32
    %39 = arith.cmpi slt, %arg1, %c0_i32_10 : i32
    %c17_i32 = arith.constant 17 : i32
    %40 = vector.broadcast %c17_i32 : i32 to vector<1x320xi32>
    %41 = arith.cmpi sle, %20, %40 : vector<1x320xi32>
    %42 = vector.broadcast %39 : i1 to vector<1x320xi1>
    %43 = arith.ori %42, %41 : vector<1x320xi1>
    %44 = arith.andi %38, %43 : vector<1x320xi1>
    %45 = arith.andi %33, %44 : vector<1x320xi1>
    %46 = arith.extui %45 : vector<1x320xi1> to vector<1x320xi32>
    %47 = arith.sitofp %46 : vector<1x320xi32> to vector<1x320xf32>
    %cst = arith.constant 0.000000e+00 : f32
    %48 = vector.broadcast %cst : f32 to vector<4x320xf32>
    %cst_11 = arith.constant 0.000000e+00 : f32
    %49 = vector.broadcast %cst_11 : f32 to vector<4x17xf32>
    %50 = vector.extract_strided_slice %16 {offsets = [0, 0], sizes = [4, 303], strides = [1, 1]} : vector<4x320xf32> to vector<4x303xf32>
    %51 = tpu.concatenate %49, %50 in 1 : vector<4x17xf32>, vector<4x303xf32> -> vector<4x320xf32>
    %52 = vector.broadcast %24 : vector<1x320xf32> to vector<4x320xf32>
    %53 = arith.mulf %51, %52 : vector<4x320xf32>
    %c0_12 = arith.constant 0 : index
    %c0_13 = arith.constant 0 : index
    %c0_14 = arith.constant 0 : index
    %54 = vector.load %arg5[%c0_12, %c0_13, %c0_14] : memref<9x4x4xf32, #tpu.memory_space<vmem>>, vector<1x4x4xf32>
    %55 = vector.shape_cast %54 : vector<1x4x4xf32> to vector<4x4xf32>
    %cst_15 = arith.constant dense<0.000000e+00> : vector<4x320xf32>
    %56 = tpu.matmul %55, %53, %cst_15 {dimension_numbers = #tpu.dot_dimension_numbers<[1], [0], [0], [1], [0, 0, 1, 1], [], []>} : vector<4x4xf32>, vector<4x320xf32>, vector<4x320xf32> -> vector<4x320xf32>
    %57 = arith.addf %48, %56 : vector<4x320xf32>
    %cst_16 = arith.constant 0.000000e+00 : f32
    %58 = vector.broadcast %cst_16 : f32 to vector<4x16xf32>
    %59 = vector.extract_strided_slice %16 {offsets = [0, 0], sizes = [4, 304], strides = [1, 1]} : vector<4x320xf32> to vector<4x304xf32>
    %60 = tpu.concatenate %58, %59 in 1 : vector<4x16xf32>, vector<4x304xf32> -> vector<4x320xf32>
    %c1 = arith.constant 1 : index
    %c0_17 = arith.constant 0 : index
    %c0_18 = arith.constant 0 : index
    %61 = vector.load %arg5[%c1, %c0_17, %c0_18] : memref<9x4x4xf32, #tpu.memory_space<vmem>>, vector<1x4x4xf32>
    %62 = vector.shape_cast %61 : vector<1x4x4xf32> to vector<4x4xf32>
    %cst_19 = arith.constant dense<0.000000e+00> : vector<4x320xf32>
    %63 = tpu.matmul %62, %60, %cst_19 {dimension_numbers = #tpu.dot_dimension_numbers<[1], [0], [0], [1], [0, 0, 1, 1], [], []>} : vector<4x4xf32>, vector<4x320xf32>, vector<4x320xf32> -> vector<4x320xf32>
    %64 = arith.addf %57, %63 : vector<4x320xf32>
    %cst_20 = arith.constant 0.000000e+00 : f32
    %65 = vector.broadcast %cst_20 : f32 to vector<4x15xf32>
    %66 = vector.extract_strided_slice %16 {offsets = [0, 0], sizes = [4, 305], strides = [1, 1]} : vector<4x320xf32> to vector<4x305xf32>
    %67 = tpu.concatenate %65, %66 in 1 : vector<4x15xf32>, vector<4x305xf32> -> vector<4x320xf32>
    %68 = vector.broadcast %28 : vector<1x320xf32> to vector<4x320xf32>
    %69 = arith.mulf %67, %68 : vector<4x320xf32>
    %c2 = arith.constant 2 : index
    %c0_21 = arith.constant 0 : index
    %c0_22 = arith.constant 0 : index
    %70 = vector.load %arg5[%c2, %c0_21, %c0_22] : memref<9x4x4xf32, #tpu.memory_space<vmem>>, vector<1x4x4xf32>
    %71 = vector.shape_cast %70 : vector<1x4x4xf32> to vector<4x4xf32>
    %cst_23 = arith.constant dense<0.000000e+00> : vector<4x320xf32>
    %72 = tpu.matmul %71, %69, %cst_23 {dimension_numbers = #tpu.dot_dimension_numbers<[1], [0], [0], [1], [0, 0, 1, 1], [], []>} : vector<4x4xf32>, vector<4x320xf32>, vector<4x320xf32> -> vector<4x320xf32>
    %73 = arith.addf %64, %72 : vector<4x320xf32>
    %cst_24 = arith.constant 0.000000e+00 : f32
    %74 = vector.broadcast %cst_24 : f32 to vector<4x1xf32>
    %75 = vector.extract_strided_slice %16 {offsets = [0, 0], sizes = [4, 319], strides = [1, 1]} : vector<4x320xf32> to vector<4x319xf32>
    %76 = tpu.concatenate %74, %75 in 1 : vector<4x1xf32>, vector<4x319xf32> -> vector<4x320xf32>
    %77 = vector.broadcast %24 : vector<1x320xf32> to vector<4x320xf32>
    %78 = arith.mulf %76, %77 : vector<4x320xf32>
    %c3 = arith.constant 3 : index
    %c0_25 = arith.constant 0 : index
    %c0_26 = arith.constant 0 : index
    %79 = vector.load %arg5[%c3, %c0_25, %c0_26] : memref<9x4x4xf32, #tpu.memory_space<vmem>>, vector<1x4x4xf32>
    %80 = vector.shape_cast %79 : vector<1x4x4xf32> to vector<4x4xf32>
    %cst_27 = arith.constant dense<0.000000e+00> : vector<4x320xf32>
    %81 = tpu.matmul %80, %78, %cst_27 {dimension_numbers = #tpu.dot_dimension_numbers<[1], [0], [0], [1], [0, 0, 1, 1], [], []>} : vector<4x4xf32>, vector<4x320xf32>, vector<4x320xf32> -> vector<4x320xf32>
    %82 = arith.addf %73, %81 : vector<4x320xf32>
    %c4 = arith.constant 4 : index
    %c0_28 = arith.constant 0 : index
    %c0_29 = arith.constant 0 : index
    %83 = vector.load %arg5[%c4, %c0_28, %c0_29] : memref<9x4x4xf32, #tpu.memory_space<vmem>>, vector<1x4x4xf32>
    %84 = vector.shape_cast %83 : vector<1x4x4xf32> to vector<4x4xf32>
    %cst_30 = arith.constant dense<0.000000e+00> : vector<4x320xf32>
    %85 = tpu.matmul %84, %16, %cst_30 {dimension_numbers = #tpu.dot_dimension_numbers<[1], [0], [0], [1], [0, 0, 1, 1], [], []>} : vector<4x4xf32>, vector<4x320xf32>, vector<4x320xf32> -> vector<4x320xf32>
    %86 = arith.addf %82, %85 : vector<4x320xf32>
    %cst_31 = arith.constant 0.000000e+00 : f32
    %87 = vector.broadcast %cst_31 : f32 to vector<4x1xf32>
    %88 = vector.extract_strided_slice %16 {offsets = [0, 1], sizes = [4, 319], strides = [1, 1]} : vector<4x320xf32> to vector<4x319xf32>
    %89 = tpu.concatenate %88, %87 in 1 : vector<4x319xf32>, vector<4x1xf32> -> vector<4x320xf32>
    %90 = vector.broadcast %28 : vector<1x320xf32> to vector<4x320xf32>
    %91 = arith.mulf %89, %90 : vector<4x320xf32>
    %c5 = arith.constant 5 : index
    %c0_32 = arith.constant 0 : index
    %c0_33 = arith.constant 0 : index
    %92 = vector.load %arg5[%c5, %c0_32, %c0_33] : memref<9x4x4xf32, #tpu.memory_space<vmem>>, vector<1x4x4xf32>
    %93 = vector.shape_cast %92 : vector<1x4x4xf32> to vector<4x4xf32>
    %cst_34 = arith.constant dense<0.000000e+00> : vector<4x320xf32>
    %94 = tpu.matmul %93, %91, %cst_34 {dimension_numbers = #tpu.dot_dimension_numbers<[1], [0], [0], [1], [0, 0, 1, 1], [], []>} : vector<4x4xf32>, vector<4x320xf32>, vector<4x320xf32> -> vector<4x320xf32>
    %95 = arith.addf %86, %94 : vector<4x320xf32>
    %cst_35 = arith.constant 0.000000e+00 : f32
    %96 = vector.broadcast %cst_35 : f32 to vector<4x15xf32>
    %97 = vector.extract_strided_slice %16 {offsets = [0, 15], sizes = [4, 305], strides = [1, 1]} : vector<4x320xf32> to vector<4x305xf32>
    %98 = tpu.concatenate %97, %96 in 1 : vector<4x305xf32>, vector<4x15xf32> -> vector<4x320xf32>
    %99 = vector.broadcast %24 : vector<1x320xf32> to vector<4x320xf32>
    %100 = arith.mulf %98, %99 : vector<4x320xf32>
    %c6 = arith.constant 6 : index
    %c0_36 = arith.constant 0 : index
    %c0_37 = arith.constant 0 : index
    %101 = vector.load %arg5[%c6, %c0_36, %c0_37] : memref<9x4x4xf32, #tpu.memory_space<vmem>>, vector<1x4x4xf32>
    %102 = vector.shape_cast %101 : vector<1x4x4xf32> to vector<4x4xf32>
    %cst_38 = arith.constant dense<0.000000e+00> : vector<4x320xf32>
    %103 = tpu.matmul %102, %100, %cst_38 {dimension_numbers = #tpu.dot_dimension_numbers<[1], [0], [0], [1], [0, 0, 1, 1], [], []>} : vector<4x4xf32>, vector<4x320xf32>, vector<4x320xf32> -> vector<4x320xf32>
    %104 = arith.addf %95, %103 : vector<4x320xf32>
    %cst_39 = arith.constant 0.000000e+00 : f32
    %105 = vector.broadcast %cst_39 : f32 to vector<4x16xf32>
    %106 = vector.extract_strided_slice %16 {offsets = [0, 16], sizes = [4, 304], strides = [1, 1]} : vector<4x320xf32> to vector<4x304xf32>
    %107 = tpu.concatenate %106, %105 in 1 : vector<4x304xf32>, vector<4x16xf32> -> vector<4x320xf32>
    %c7 = arith.constant 7 : index
    %c0_40 = arith.constant 0 : index
    %c0_41 = arith.constant 0 : index
    %108 = vector.load %arg5[%c7, %c0_40, %c0_41] : memref<9x4x4xf32, #tpu.memory_space<vmem>>, vector<1x4x4xf32>
    %109 = vector.shape_cast %108 : vector<1x4x4xf32> to vector<4x4xf32>
    %cst_42 = arith.constant dense<0.000000e+00> : vector<4x320xf32>
    %110 = tpu.matmul %109, %107, %cst_42 {dimension_numbers = #tpu.dot_dimension_numbers<[1], [0], [0], [1], [0, 0, 1, 1], [], []>} : vector<4x4xf32>, vector<4x320xf32>, vector<4x320xf32> -> vector<4x320xf32>
    %111 = arith.addf %104, %110 : vector<4x320xf32>
    %cst_43 = arith.constant 0.000000e+00 : f32
    %112 = vector.broadcast %cst_43 : f32 to vector<4x17xf32>
    %113 = vector.extract_strided_slice %16 {offsets = [0, 17], sizes = [4, 303], strides = [1, 1]} : vector<4x320xf32> to vector<4x303xf32>
    %114 = tpu.concatenate %113, %112 in 1 : vector<4x303xf32>, vector<4x17xf32> -> vector<4x320xf32>
    %115 = vector.broadcast %28 : vector<1x320xf32> to vector<4x320xf32>
    %116 = arith.mulf %114, %115 : vector<4x320xf32>
    %c8 = arith.constant 8 : index
    %c0_44 = arith.constant 0 : index
    %c0_45 = arith.constant 0 : index
    %117 = vector.load %arg5[%c8, %c0_44, %c0_45] : memref<9x4x4xf32, #tpu.memory_space<vmem>>, vector<1x4x4xf32>
    %118 = vector.shape_cast %117 : vector<1x4x4xf32> to vector<4x4xf32>
    %cst_46 = arith.constant dense<0.000000e+00> : vector<4x320xf32>
    %119 = tpu.matmul %118, %116, %cst_46 {dimension_numbers = #tpu.dot_dimension_numbers<[1], [0], [0], [1], [0, 0, 1, 1], [], []>} : vector<4x4xf32>, vector<4x320xf32>, vector<4x320xf32> -> vector<4x320xf32>
    %120 = arith.addf %111, %119 : vector<4x320xf32>
    %c0_47 = arith.constant 0 : index
    %c0_48 = arith.constant 0 : index
    %121 = vector.load %arg7[%c0_47, %c0_48] : memref<4x1xf32, #tpu.memory_space<vmem>>, vector<4x1xf32>
    %122 = vector.broadcast %121 : vector<4x1xf32> to vector<4x320xf32>
    %123 = arith.mulf %120, %122 : vector<4x320xf32>
    %c0_49 = arith.constant 0 : index
    %c0_50 = arith.constant 0 : index
    %124 = vector.load %arg8[%c0_49, %c0_50] : memref<4x1xf32, #tpu.memory_space<vmem>>, vector<4x1xf32>
    %125 = vector.broadcast %124 : vector<4x1xf32> to vector<4x320xf32>
    %126 = arith.addf %123, %125 : vector<4x320xf32>
    %cst_51 = arith.constant 0.000000e+00 : f32
    %127 = vector.broadcast %cst_51 : f32 to vector<4x320xf32>
    %128 = arith.maximumf %126, %127 : vector<4x320xf32>
    %129 = vector.broadcast %47 : vector<1x320xf32> to vector<4x320xf32>
    %130 = arith.mulf %128, %129 : vector<4x320xf32>
    %cst_52 = arith.constant 0.000000e+00 : f32
    %131 = vector.broadcast %cst_52 : f32 to vector<4x320xf32>
    %cst_53 = arith.constant 0.000000e+00 : f32
    %132 = vector.broadcast %cst_53 : f32 to vector<4x17xf32>
    %133 = vector.extract_strided_slice %130 {offsets = [0, 0], sizes = [4, 303], strides = [1, 1]} : vector<4x320xf32> to vector<4x303xf32>
    %134 = tpu.concatenate %132, %133 in 1 : vector<4x17xf32>, vector<4x303xf32> -> vector<4x320xf32>
    %135 = vector.broadcast %24 : vector<1x320xf32> to vector<4x320xf32>
    %136 = arith.mulf %134, %135 : vector<4x320xf32>
    %c0_54 = arith.constant 0 : index
    %c0_55 = arith.constant 0 : index
    %c0_56 = arith.constant 0 : index
    %137 = vector.load %arg6[%c0_54, %c0_55, %c0_56] : memref<9x4x4xf32, #tpu.memory_space<vmem>>, vector<1x4x4xf32>
    %138 = vector.shape_cast %137 : vector<1x4x4xf32> to vector<4x4xf32>
    %cst_57 = arith.constant dense<0.000000e+00> : vector<4x320xf32>
    %139 = tpu.matmul %138, %136, %cst_57 {dimension_numbers = #tpu.dot_dimension_numbers<[1], [0], [0], [1], [0, 0, 1, 1], [], []>} : vector<4x4xf32>, vector<4x320xf32>, vector<4x320xf32> -> vector<4x320xf32>
    %140 = arith.addf %131, %139 : vector<4x320xf32>
    %cst_58 = arith.constant 0.000000e+00 : f32
    %141 = vector.broadcast %cst_58 : f32 to vector<4x16xf32>
    %142 = vector.extract_strided_slice %130 {offsets = [0, 0], sizes = [4, 304], strides = [1, 1]} : vector<4x320xf32> to vector<4x304xf32>
    %143 = tpu.concatenate %141, %142 in 1 : vector<4x16xf32>, vector<4x304xf32> -> vector<4x320xf32>
    %c1_59 = arith.constant 1 : index
    %c0_60 = arith.constant 0 : index
    %c0_61 = arith.constant 0 : index
    %144 = vector.load %arg6[%c1_59, %c0_60, %c0_61] : memref<9x4x4xf32, #tpu.memory_space<vmem>>, vector<1x4x4xf32>
    %145 = vector.shape_cast %144 : vector<1x4x4xf32> to vector<4x4xf32>
    %cst_62 = arith.constant dense<0.000000e+00> : vector<4x320xf32>
    %146 = tpu.matmul %145, %143, %cst_62 {dimension_numbers = #tpu.dot_dimension_numbers<[1], [0], [0], [1], [0, 0, 1, 1], [], []>} : vector<4x4xf32>, vector<4x320xf32>, vector<4x320xf32> -> vector<4x320xf32>
    %147 = arith.addf %140, %146 : vector<4x320xf32>
    %cst_63 = arith.constant 0.000000e+00 : f32
    %148 = vector.broadcast %cst_63 : f32 to vector<4x15xf32>
    %149 = vector.extract_strided_slice %130 {offsets = [0, 0], sizes = [4, 305], strides = [1, 1]} : vector<4x320xf32> to vector<4x305xf32>
    %150 = tpu.concatenate %148, %149 in 1 : vector<4x15xf32>, vector<4x305xf32> -> vector<4x320xf32>
    %151 = vector.broadcast %28 : vector<1x320xf32> to vector<4x320xf32>
    %152 = arith.mulf %150, %151 : vector<4x320xf32>
    %c2_64 = arith.constant 2 : index
    %c0_65 = arith.constant 0 : index
    %c0_66 = arith.constant 0 : index
    %153 = vector.load %arg6[%c2_64, %c0_65, %c0_66] : memref<9x4x4xf32, #tpu.memory_space<vmem>>, vector<1x4x4xf32>
    %154 = vector.shape_cast %153 : vector<1x4x4xf32> to vector<4x4xf32>
    %cst_67 = arith.constant dense<0.000000e+00> : vector<4x320xf32>
    %155 = tpu.matmul %154, %152, %cst_67 {dimension_numbers = #tpu.dot_dimension_numbers<[1], [0], [0], [1], [0, 0, 1, 1], [], []>} : vector<4x4xf32>, vector<4x320xf32>, vector<4x320xf32> -> vector<4x320xf32>
    %156 = arith.addf %147, %155 : vector<4x320xf32>
    %cst_68 = arith.constant 0.000000e+00 : f32
    %157 = vector.broadcast %cst_68 : f32 to vector<4x1xf32>
    %158 = vector.extract_strided_slice %130 {offsets = [0, 0], sizes = [4, 319], strides = [1, 1]} : vector<4x320xf32> to vector<4x319xf32>
    %159 = tpu.concatenate %157, %158 in 1 : vector<4x1xf32>, vector<4x319xf32> -> vector<4x320xf32>
    %160 = vector.broadcast %24 : vector<1x320xf32> to vector<4x320xf32>
    %161 = arith.mulf %159, %160 : vector<4x320xf32>
    %c3_69 = arith.constant 3 : index
    %c0_70 = arith.constant 0 : index
    %c0_71 = arith.constant 0 : index
    %162 = vector.load %arg6[%c3_69, %c0_70, %c0_71] : memref<9x4x4xf32, #tpu.memory_space<vmem>>, vector<1x4x4xf32>
    %163 = vector.shape_cast %162 : vector<1x4x4xf32> to vector<4x4xf32>
    %cst_72 = arith.constant dense<0.000000e+00> : vector<4x320xf32>
    %164 = tpu.matmul %163, %161, %cst_72 {dimension_numbers = #tpu.dot_dimension_numbers<[1], [0], [0], [1], [0, 0, 1, 1], [], []>} : vector<4x4xf32>, vector<4x320xf32>, vector<4x320xf32> -> vector<4x320xf32>
    %165 = arith.addf %156, %164 : vector<4x320xf32>
    %c4_73 = arith.constant 4 : index
    %c0_74 = arith.constant 0 : index
    %c0_75 = arith.constant 0 : index
    %166 = vector.load %arg6[%c4_73, %c0_74, %c0_75] : memref<9x4x4xf32, #tpu.memory_space<vmem>>, vector<1x4x4xf32>
    %167 = vector.shape_cast %166 : vector<1x4x4xf32> to vector<4x4xf32>
    %cst_76 = arith.constant dense<0.000000e+00> : vector<4x320xf32>
    %168 = tpu.matmul %167, %130, %cst_76 {dimension_numbers = #tpu.dot_dimension_numbers<[1], [0], [0], [1], [0, 0, 1, 1], [], []>} : vector<4x4xf32>, vector<4x320xf32>, vector<4x320xf32> -> vector<4x320xf32>
    %169 = arith.addf %165, %168 : vector<4x320xf32>
    %cst_77 = arith.constant 0.000000e+00 : f32
    %170 = vector.broadcast %cst_77 : f32 to vector<4x1xf32>
    %171 = vector.extract_strided_slice %130 {offsets = [0, 1], sizes = [4, 319], strides = [1, 1]} : vector<4x320xf32> to vector<4x319xf32>
    %172 = tpu.concatenate %171, %170 in 1 : vector<4x319xf32>, vector<4x1xf32> -> vector<4x320xf32>
    %173 = vector.broadcast %28 : vector<1x320xf32> to vector<4x320xf32>
    %174 = arith.mulf %172, %173 : vector<4x320xf32>
    %c5_78 = arith.constant 5 : index
    %c0_79 = arith.constant 0 : index
    %c0_80 = arith.constant 0 : index
    %175 = vector.load %arg6[%c5_78, %c0_79, %c0_80] : memref<9x4x4xf32, #tpu.memory_space<vmem>>, vector<1x4x4xf32>
    %176 = vector.shape_cast %175 : vector<1x4x4xf32> to vector<4x4xf32>
    %cst_81 = arith.constant dense<0.000000e+00> : vector<4x320xf32>
    %177 = tpu.matmul %176, %174, %cst_81 {dimension_numbers = #tpu.dot_dimension_numbers<[1], [0], [0], [1], [0, 0, 1, 1], [], []>} : vector<4x4xf32>, vector<4x320xf32>, vector<4x320xf32> -> vector<4x320xf32>
    %178 = arith.addf %169, %177 : vector<4x320xf32>
    %cst_82 = arith.constant 0.000000e+00 : f32
    %179 = vector.broadcast %cst_82 : f32 to vector<4x15xf32>
    %180 = vector.extract_strided_slice %130 {offsets = [0, 15], sizes = [4, 305], strides = [1, 1]} : vector<4x320xf32> to vector<4x305xf32>
    %181 = tpu.concatenate %180, %179 in 1 : vector<4x305xf32>, vector<4x15xf32> -> vector<4x320xf32>
    %182 = vector.broadcast %24 : vector<1x320xf32> to vector<4x320xf32>
    %183 = arith.mulf %181, %182 : vector<4x320xf32>
    %c6_83 = arith.constant 6 : index
    %c0_84 = arith.constant 0 : index
    %c0_85 = arith.constant 0 : index
    %184 = vector.load %arg6[%c6_83, %c0_84, %c0_85] : memref<9x4x4xf32, #tpu.memory_space<vmem>>, vector<1x4x4xf32>
    %185 = vector.shape_cast %184 : vector<1x4x4xf32> to vector<4x4xf32>
    %cst_86 = arith.constant dense<0.000000e+00> : vector<4x320xf32>
    %186 = tpu.matmul %185, %183, %cst_86 {dimension_numbers = #tpu.dot_dimension_numbers<[1], [0], [0], [1], [0, 0, 1, 1], [], []>} : vector<4x4xf32>, vector<4x320xf32>, vector<4x320xf32> -> vector<4x320xf32>
    %187 = arith.addf %178, %186 : vector<4x320xf32>
    %cst_87 = arith.constant 0.000000e+00 : f32
    %188 = vector.broadcast %cst_87 : f32 to vector<4x16xf32>
    %189 = vector.extract_strided_slice %130 {offsets = [0, 16], sizes = [4, 304], strides = [1, 1]} : vector<4x320xf32> to vector<4x304xf32>
    %190 = tpu.concatenate %189, %188 in 1 : vector<4x304xf32>, vector<4x16xf32> -> vector<4x320xf32>
    %c7_88 = arith.constant 7 : index
    %c0_89 = arith.constant 0 : index
    %c0_90 = arith.constant 0 : index
    %191 = vector.load %arg6[%c7_88, %c0_89, %c0_90] : memref<9x4x4xf32, #tpu.memory_space<vmem>>, vector<1x4x4xf32>
    %192 = vector.shape_cast %191 : vector<1x4x4xf32> to vector<4x4xf32>
    %cst_91 = arith.constant dense<0.000000e+00> : vector<4x320xf32>
    %193 = tpu.matmul %192, %190, %cst_91 {dimension_numbers = #tpu.dot_dimension_numbers<[1], [0], [0], [1], [0, 0, 1, 1], [], []>} : vector<4x4xf32>, vector<4x320xf32>, vector<4x320xf32> -> vector<4x320xf32>
    %194 = arith.addf %187, %193 : vector<4x320xf32>
    %cst_92 = arith.constant 0.000000e+00 : f32
    %195 = vector.broadcast %cst_92 : f32 to vector<4x17xf32>
    %196 = vector.extract_strided_slice %130 {offsets = [0, 17], sizes = [4, 303], strides = [1, 1]} : vector<4x320xf32> to vector<4x303xf32>
    %197 = tpu.concatenate %196, %195 in 1 : vector<4x303xf32>, vector<4x17xf32> -> vector<4x320xf32>
    %198 = vector.broadcast %28 : vector<1x320xf32> to vector<4x320xf32>
    %199 = arith.mulf %197, %198 : vector<4x320xf32>
    %c8_93 = arith.constant 8 : index
    %c0_94 = arith.constant 0 : index
    %c0_95 = arith.constant 0 : index
    %200 = vector.load %arg6[%c8_93, %c0_94, %c0_95] : memref<9x4x4xf32, #tpu.memory_space<vmem>>, vector<1x4x4xf32>
    %201 = vector.shape_cast %200 : vector<1x4x4xf32> to vector<4x4xf32>
    %cst_96 = arith.constant dense<0.000000e+00> : vector<4x320xf32>
    %202 = tpu.matmul %201, %199, %cst_96 {dimension_numbers = #tpu.dot_dimension_numbers<[1], [0], [0], [1], [0, 0, 1, 1], [], []>} : vector<4x4xf32>, vector<4x320xf32>, vector<4x320xf32> -> vector<4x320xf32>
    %203 = arith.addf %194, %202 : vector<4x320xf32>
    %c0_97 = arith.constant 0 : index
    %c0_98 = arith.constant 0 : index
    %204 = vector.load %arg9[%c0_97, %c0_98] : memref<4x1xf32, #tpu.memory_space<vmem>>, vector<4x1xf32>
    %205 = vector.broadcast %204 : vector<4x1xf32> to vector<4x320xf32>
    %206 = arith.mulf %203, %205 : vector<4x320xf32>
    %c0_99 = arith.constant 0 : index
    %c0_100 = arith.constant 0 : index
    %207 = vector.load %arg10[%c0_99, %c0_100] : memref<4x1xf32, #tpu.memory_space<vmem>>, vector<4x1xf32>
    %208 = vector.broadcast %207 : vector<4x1xf32> to vector<4x320xf32>
    %209 = arith.addf %206, %208 : vector<4x320xf32>
    %210 = vector.extract_strided_slice %209 {offsets = [0, 32], sizes = [4, 256], strides = [1, 1]} : vector<4x320xf32> to vector<4x256xf32>
    %211 = arith.addf %210, %7 : vector<4x256xf32>
    %cst_101 = arith.constant 0.000000e+00 : f32
    %212 = vector.broadcast %cst_101 : f32 to vector<4x256xf32>
    %213 = arith.maximumf %211, %212 : vector<4x256xf32>
    %214 = vector.shape_cast %213 : vector<4x256xf32> to vector<1x4x256xf32>
    %c0_102 = arith.constant 0 : index
    %c0_103 = arith.constant 0 : index
    %c0_104 = arith.constant 0 : index
    %215 = vector.load %arg11[%c0_102, %c0_103, %c0_104] : memref<1x4x256xf32, #tpu.memory_space<vmem>>, vector<1x4x256xf32>
    tpu.vector_store %arg11[%c0_102, %c0_103, %c0_104], %214 {strides = array<i32>} : memref<1x4x256xf32, #tpu.memory_space<vmem>>, vector<1x4x256xf32>,
    return
  }
  func.func @transform_0(%arg0: i32, %arg1: i32) -> (i32, i32, i32) {
    %c0_i32 = arith.constant 0 : i32
    %c0_i32_0 = arith.constant 0 : i32
    return %arg0, %c0_i32, %arg1 : i32, i32, i32
  }
  func.func @transform_1(%arg0: i32, %arg1: i32) -> (i32, i32, i32) {
    %c2_i32 = arith.constant 2 : i32
    %0 = arith.muli %arg1, %c2_i32 : i32
    %c1_i32 = arith.constant 1 : i32
    %1 = arith.subi %0, %c1_i32 : i32
    %c0_i32 = arith.constant 0 : i32
    %2 = arith.maxsi %1, %c0_i32 : i32
    %c0_i32_0 = arith.constant 0 : i32
    %c0_i32_1 = arith.constant 0 : i32
    return %arg0, %c0_i32_0, %2 : i32, i32, i32
  }
  func.func @transform_2(%arg0: i32, %arg1: i32) -> (i32, i32, i32) {
    %c1_i32 = arith.constant 1 : i32
    %0 = arith.addi %arg1, %c1_i32 : i32
    %c2_i32 = arith.constant 2 : i32
    %1 = arith.muli %0, %c2_i32 : i32
    %c1_i32_0 = arith.constant 1 : i32
    %2 = arith.minsi %1, %c1_i32_0 : i32
    %c0_i32 = arith.constant 0 : i32
    %c0_i32_1 = arith.constant 0 : i32
    return %arg0, %c0_i32, %2 : i32, i32, i32
  }
  func.func @transform_3(%arg0: i32, %arg1: i32) -> (i32, i32, i32) {
    %c0_i32 = arith.constant 0 : i32
    %c0_i32_0 = arith.constant 0 : i32
    %c0_i32_1 = arith.constant 0 : i32
    %c0_i32_2 = arith.constant 0 : i32
    return %c0_i32, %c0_i32_0, %c0_i32_1 : i32, i32, i32
  }
  func.func @transform_4(%arg0: i32, %arg1: i32) -> (i32, i32, i32) {
    %c0_i32 = arith.constant 0 : i32
    %c0_i32_0 = arith.constant 0 : i32
    %c0_i32_1 = arith.constant 0 : i32
    %c0_i32_2 = arith.constant 0 : i32
    return %c0_i32, %c0_i32_0, %c0_i32_1 : i32, i32, i32
  }
  func.func @transform_5(%arg0: i32, %arg1: i32) -> (i32, i32) {
    %c0_i32 = arith.constant 0 : i32
    %c0_i32_0 = arith.constant 0 : i32
    %c0_i32_1 = arith.constant 0 : i32
    return %c0_i32, %c0_i32_0 : i32, i32
  }
  func.func @transform_6(%arg0: i32, %arg1: i32) -> (i32, i32) {
    %c0_i32 = arith.constant 0 : i32
    %c0_i32_0 = arith.constant 0 : i32
    %c0_i32_1 = arith.constant 0 : i32
    return %c0_i32, %c0_i32_0 : i32, i32
  }
  func.func @transform_7(%arg0: i32, %arg1: i32) -> (i32, i32) {
    %c0_i32 = arith.constant 0 : i32
    %c0_i32_0 = arith.constant 0 : i32
    %c0_i32_1 = arith.constant 0 : i32
    return %c0_i32, %c0_i32_0 : i32, i32
  }
  func.func @transform_8(%arg0: i32, %arg1: i32) -> (i32, i32) {
    %c0_i32 = arith.constant 0 : i32
    %c0_i32_0 = arith.constant 0 : i32
    %c0_i32_1 = arith.constant 0 : i32
    return %c0_i32, %c0_i32_0 : i32, i32
  }
  func.func @transform_9(%arg0: i32, %arg1: i32) -> (i32, i32, i32) {
    %c0_i32 = arith.constant 0 : i32
    %c0_i32_0 = arith.constant 0 : i32
    return %arg0, %c0_i32, %arg1 : i32, i32, i32
  }
}

</mosaic_0001>

<llo_original>
// kernel: residual_block_nchw.1
$region0: #{residual_block_nchw.1}
  #allocation0 [shape = 'u32[]', space=smem, size = 0x4, offset = 0x4, fixed_abs, tag = 'smem constant byte address 0x4 - core index']
  #allocation1 [shape = 'u32[72,128]{1,0:T(1,128)}', space=vmem, size = 0x9000, scoped, tag = 'internal scratch']
  %s0 = inlined_call_operand.vmem [shape: f32[2,4,256], index: 0, kind: input, shape index: {}, may-alias: {0,1,2}]
  %s1 = inlined_call_operand.vmem [shape: f32[2,4,256], index: 1, kind: input, shape index: {}, may-alias: {0,1,2}]
  %s2 = inlined_call_operand.vmem [shape: f32[2,4,256], index: 2, kind: input, shape index: {}, may-alias: {0,1,2}]
  %s3 = inlined_call_operand.vmem [shape: f32[9,4,4], index: 3, kind: input, shape index: {}]
  %s4 = inlined_call_operand.vmem [shape: f32[9,4,4], index: 4, kind: input, shape index: {}]
  %s5 = inlined_call_operand.vmem [shape: f32[4,1], index: 5, kind: input, shape index: {}]
  %s6 = inlined_call_operand.vmem [shape: f32[4,1], index: 6, kind: input, shape index: {}]
  %s7 = inlined_call_operand.vmem [shape: f32[4,1], index: 7, kind: input, shape index: {}]
  %s8 = inlined_call_operand.vmem [shape: f32[4,1], index: 8, kind: input, shape index: {}]
  %s9 = inlined_call_operand.vmem [shape: f32[2,4,256], index: 9, kind: output, shape index: {}]
  %s10 = sld [smem:[#allocation0]]
  $region69: #{residual_block_nchw.1} parent=0
    _
  %s12 = ssub.s32 1, %s10
  %s13 = scalar_select 0, %s12, %s10
  loop: start=0, step=1, limit=4
  $region2: #{residual_block_nchw.1} parent=0 // loop_pre_header
    _
  $region3: #{residual_block_nchw.1} parent=0 // loop_header
    %s15 = sphi 0, %s19
    %p16 = scmp.ge.s32.totalorder %s15, 4
    %s22 = sphi 0, %s34
    %s23 = sphi 0, %s30
    %s24 = sphi 0, %s22
    %s25 = sphi 0, %s23
    %s26 = sphi 0, %s24
    %s27 = sphi 0, %s25
    %s39 = sphi 0, %s41
    %s42 = sphi 0, %s39
    %s43 = sphi 0, %s42
    %s59 = sphi 0, %s43
    %s75 = sphi 0, %s77
    %s78 = sphi 0, %s75
    %s79 = sphi 0, %s78
    %s95 = sphi 0, %s79
    %s111 = sphi 0, %s113
    %s114 = sphi 0, %s111
    %s115 = sphi 0, %s114
    %s131 = sphi 0, %s115
    %s135 = sphi 0, %s135
    %s137 = sphi 0, %s135
    %s138 = sphi 0, %s137
    %s152 = sphi 0, %s138
    %s156 = sphi 0, %s156
    %s158 = sphi 0, %s156
    %s159 = sphi 0, %s158
    %s173 = sphi 0, %s159
    %s177 = sphi 0, %s177
    %s179 = sphi 0, %s177
    %s180 = sphi 0, %s179
    %s194 = sphi 0, %s180
    %s198 = sphi 0, %s198
    %s200 = sphi 0, %s198
    %s201 = sphi 0, %s200
    %s215 = sphi 0, %s201
    %s219 = sphi 0, %s219
    %s221 = sphi 0, %s219
    %s222 = sphi 0, %s221
    %s236 = sphi 0, %s222
    %s240 = sphi 0, %s240
    %s242 = sphi 0, %s240
    %s243 = sphi 0, %s242
    %s257 = sphi 0, %s243
    %s265 = sphi 0, %s267
    %s268 = sphi 0, %s265
    %s269 = sphi 0, %s268
    %s285 = sphi 0, %s269
  $region4: #{residual_block_nchw.1} parent=0 // loop_header_branch
    %18 = sbr.rel (%p16) target = $region8
  $region5: #{residual_block_nchw.1} parent=0 // loop_body
    %s20 = ssub.s32 %s15, 1
    %s21 = ssub.s32 %s15, 2
    %s28 = sadd.s32 1, %s23
    %p29 = scmp.ge.s32.totalorder %s28, 1
    %s30 = scalar_select %p29, 0, %s28
    %s31 = sadd.s32 1, %s22
    %s32 = scalar_select %p29, %s31, %s22
    %p33 = scmp.ge.s32.totalorder %s32, 2
    %s34 = scalar_select %p33, 0, %s32
    %s35 = ssub.s32 %s22, %s34
    %s36 = ssub.s32 %s23, %s30
    %s37 = sor.u32 %s35, %s36
    %p38 = scmp.eq.s32.totalorder %s37, 0
    %s40 = sadd.s32 %s39, 1
    %s41 = scalar_select %p38, %s39, %s40
    %p44 = pneg %p38
    %p45 = scmp.eq.s32.totalorder %s15, 1
    %p46 = por %p44, %p45
    %p47 = scmp.ne.s32.totalorder %s39, %s42
    %p48 = scmp.eq.s32.totalorder %s15, 0
    %p49 = por %p47, %p48
    %p50 = scmp.ne.s32.totalorder %s39, %s42
    %p51 = scmp.eq.s32.totalorder %s20, 1
    %p52 = por %p50, %p51
    %p53 = scmp.ne.s32.totalorder %s42, %s43
    %p54 = scmp.eq.s32.totalorder %s20, 0
    %p55 = por %p53, %p54
    %p56 = scmp.ne.s32.totalorder %s42, %s43
    %p57 = scmp.eq.s32.totalorder %s21, 1
    %p58 = por %p56, %p57
    %p60 = scmp.ne.s32.totalorder %s43, %s59
    %p61 = scmp.eq.s32.totalorder %s21, 0
    %p62 = por %p60, %p61
    %s63 = smul.u32 %s23, 2
    %s64 = ssub.s32 %s63, 1
    %p65 = scmp.gt.s32.totalorder %s64, 0
    %s66 = scalar_select %p65, %s64, 0
    %s67 = smul.u32 %s30, 2
    %s68 = ssub.s32 %s67, 1
    %p69 = scmp.gt.s32.totalorder %s68, 0
    %s70 = scalar_select %p69, %s68, 0
    %s71 = ssub.s32 %s22, %s34
    %s72 = ssub.s32 %s66, %s70
    %s73 = sor.u32 %s71, %s72
    %p74 = scmp.eq.s32.totalorder %s73, 0
    %s76 = sadd.s32 %s75, 1
    %s77 = scalar_select %p74, %s75, %s76
    %p80 = pneg %p74
    %p81 = scmp.eq.s32.totalorder %s15, 1
    %p82 = por %p80, %p81
    %p83 = scmp.ne.s32.totalorder %s75, %s78
    %p84 = scmp.eq.s32.totalorder %s15, 0
    %p85 = por %p83, %p84
    %p86 = scmp.ne.s32.totalorder %s75, %s78
    %p87 = scmp.eq.s32.totalorder %s20, 1
    %p88 = por %p86, %p87
    %p89 = scmp.ne.s32.totalorder %s78, %s79
    %p90 = scmp.eq.s32.totalorder %s20, 0
    %p91 = por %p89, %p90
    %p92 = scmp.ne.s32.totalorder %s78, %s79
    %p93 = scmp.eq.s32.totalorder %s21, 1
    %p94 = por %p92, %p93
    %p96 = scmp.ne.s32.totalorder %s79, %s95
    %p97 = scmp.eq.s32.totalorder %s21, 0
    %p98 = por %p96, %p97
    %s99 = sadd.s32 %s23, 1
    %s100 = smul.u32 %s99, 2
    %p101 = scmp.lt.s32.totalorder %s100, 1
    %s102 = scalar_select %p101, %s100, 1
    %s103 = sadd.s32 %s30, 1
    %s104 = smul.u32 %s103, 2
    %p105 = scmp.lt.s32.totalorder %s104, 1
    %s106 = scalar_select %p105, %s104, 1
    %s107 = ssub.s32 %s22, %s34
    %s108 = ssub.s32 %s102, %s106
    %s109 = sor.u32 %s107, %s108
    %p110 = scmp.eq.s32.totalorder %s109, 0
    %s112 = sadd.s32 %s111, 1
    %s113 = scalar_select %p110, %s111, %s112
    %p116 = pneg %p110
    %p117 = scmp.eq.s32.totalorder %s15, 1
    %p118 = por %p116, %p117
    %p119 = scmp.ne.s32.totalorder %s111, %s114
    %p120 = scmp.eq.s32.totalorder %s15, 0
    %p121 = por %p119, %p120
    %p122 = scmp.ne.s32.totalorder %s111, %s114
    %p123 = scmp.eq.s32.totalorder %s20, 1
    %p124 = por %p122, %p123
    %p125 = scmp.ne.s32.totalorder %s114, %s115
    %p126 = scmp.eq.s32.totalorder %s20, 0
    %p127 = por %p125, %p126
    %p128 = scmp.ne.s32.totalorder %s114, %s115
    %p129 = scmp.eq.s32.totalorder %s21, 1
    %p130 = por %p128, %p129
    %p132 = scmp.ne.s32.totalorder %s115, %s131
    %p133 = scmp.eq.s32.totalorder %s21, 0
    %p134 = por %p132, %p133
    %s136 = sadd.s32 %s135, 1
    %p139 = scmp.eq.s32.totalorder %s15, 1
    %p140 = scmp.ne.s32.totalorder %s135, %s137
    %p141 = scmp.eq.s32.totalorder %s15, 0
    %p142 = por %p140, %p141
    %p143 = scmp.ne.s32.totalorder %s135, %s137
    %p144 = scmp.eq.s32.totalorder %s20, 1
    %p145 = por %p143, %p144
    %p146 = scmp.ne.s32.totalorder %s137, %s138
    %p147 = scmp.eq.s32.totalorder %s20, 0
    %p148 = por %p146, %p147
    %p149 = scmp.ne.s32.totalorder %s137, %s138
    %p150 = scmp.eq.s32.totalorder %s21, 1
    %p151 = por %p149, %p150
    %p153 = scmp.ne.s32.totalorder %s138, %s152
    %p154 = scmp.eq.s32.totalorder %s21, 0
    %p155 = por %p153, %p154
    %s157 = sadd.s32 %s156, 1
    %p160 = scmp.eq.s32.totalorder %s15, 1
    %p161 = scmp.ne.s32.totalorder %s156, %s158
    %p162 = scmp.eq.s32.totalorder %s15, 0
    %p163 = por %p161, %p162
    %p164 = scmp.ne.s32.totalorder %s156, %s158
    %p165 = scmp.eq.s32.totalorder %s20, 1
    %p166 = por %p164, %p165
    %p167 = scmp.ne.s32.totalorder %s158, %s159
    %p168 = scmp.eq.s32.totalorder %s20, 0
    %p169 = por %p167, %p168
    %p170 = scmp.ne.s32.totalorder %s158, %s159
    %p171 = scmp.eq.s32.totalorder %s21, 1
    %p172 = por %p170, %p171
    %p174 = scmp.ne.s32.totalorder %s159, %s173
    %p175 = scmp.eq.s32.totalorder %s21, 0
    %p176 = por %p174, %p175
    %s178 = sadd.s32 %s177, 1
    %p181 = scmp.eq.s32.totalorder %s15, 1
    %p182 = scmp.ne.s32.totalorder %s177, %s179
    %p183 = scmp.eq.s32.totalorder %s15, 0
    %p184 = por %p182, %p183
    %p185 = scmp.ne.s32.totalorder %s177, %s179
    %p186 = scmp.eq.s32.totalorder %s20, 1
    %p187 = por %p185, %p186
    %p188 = scmp.ne.s32.totalorder %s179, %s180
    %p189 = scmp.eq.s32.totalorder %s20, 0
    %p190 = por %p188, %p189
    %p191 = scmp.ne.s32.totalorder %s179, %s180
    %p192 = scmp.eq.s32.totalorder %s21, 1
    %p193 = por %p191, %p192
    %p195 = scmp.ne.s32.totalorder %s180, %s194
    %p196 = scmp.eq.s32.totalorder %s21, 0
    %p197 = por %p195, %p196
    %s199 = sadd.s32 %s198, 1
    %p202 = scmp.eq.s32.totalorder %s15, 1
    %p203 = scmp.ne.s32.totalorder %s198, %s200
    %p204 = scmp.eq.s32.totalorder %s15, 0
    %p205 = por %p203, %p204
    %p206 = scmp.ne.s32.totalorder %s198, %s200
    %p207 = scmp.eq.s32.totalorder %s20, 1
    %p208 = por %p206, %p207
    %p209 = scmp.ne.s32.totalorder %s200, %s201
    %p210 = scmp.eq.s32.totalorder %s20, 0
    %p211 = por %p209, %p210
    %p212 = scmp.ne.s32.totalorder %s200, %s201
    %p213 = scmp.eq.s32.totalorder %s21, 1
    %p214 = por %p212, %p213
    %p216 = scmp.ne.s32.totalorder %s201, %s215
    %p217 = scmp.eq.s32.totalorder %s21, 0
    %p218 = por %p216, %p217
    %s220 = sadd.s32 %s219, 1
    %p223 = scmp.eq.s32.totalorder %s15, 1
    %p224 = scmp.ne.s32.totalorder %s219, %s221
    %p225 = scmp.eq.s32.totalorder %s15, 0
    %p226 = por %p224, %p225
    %p227 = scmp.ne.s32.totalorder %s219, %s221
    %p228 = scmp.eq.s32.totalorder %s20, 1
    %p229 = por %p227, %p228
    %p230 = scmp.ne.s32.totalorder %s221, %s222
    %p231 = scmp.eq.s32.totalorder %s20, 0
    %p232 = por %p230, %p231
    %p233 = scmp.ne.s32.totalorder %s221, %s222
    %p234 = scmp.eq.s32.totalorder %s21, 1
    %p235 = por %p233, %p234
    %p237 = scmp.ne.s32.totalorder %s222, %s236
    %p238 = scmp.eq.s32.totalorder %s21, 0
    %p239 = por %p237, %p238
    %s241 = sadd.s32 %s240, 1
    %p244 = scmp.eq.s32.totalorder %s15, 1
    %p245 = scmp.ne.s32.totalorder %s240, %s242
    %p246 = scmp.eq.s32.totalorder %s15, 0
    %p247 = por %p245, %p246
    %p248 = scmp.ne.s32.totalorder %s240, %s242
    %p249 = scmp.eq.s32.totalorder %s20, 1
    %p250 = por %p248, %p249
    %p251 = scmp.ne.s32.totalorder %s242, %s243
    %p252 = scmp.eq.s32.totalorder %s20, 0
    %p253 = por %p251, %p252
    %p254 = scmp.ne.s32.totalorder %s242, %s243
    %p255 = scmp.eq.s32.totalorder %s21, 1
    %p256 = por %p254, %p255
    %p258 = scmp.ne.s32.totalorder %s243, %s257
    %p259 = scmp.eq.s32.totalorder %s21, 0
    %p260 = por %p258, %p259
    %s261 = ssub.s32 %s22, %s34
    %s262 = ssub.s32 %s23, %s30
    %s263 = sor.u32 %s261, %s262
    %p264 = scmp.eq.s32.totalorder %s263, 0
    %s266 = sadd.s32 %s265, 1
    %s267 = scalar_select %p264, %s265, %s266
    %p270 = pneg %p264
    %p271 = scmp.eq.s32.totalorder %s15, 1
    %p272 = por %p270, %p271
    %p273 = scmp.ne.s32.totalorder %s265, %s268
    %p274 = scmp.eq.s32.totalorder %s15, 0
    %p275 = por %p273, %p274
    %p276 = scmp.ne.s32.totalorder %s265, %s268
    %p277 = scmp.eq.s32.totalorder %s20, 1
    %p278 = por %p276, %p277
    %p279 = scmp.ne.s32.totalorder %s268, %s269
    %p280 = scmp.eq.s32.totalorder %s20, 0
    %p281 = por %p279, %p280
    %p282 = scmp.ne.s32.totalorder %s268, %s269
    %p283 = scmp.eq.s32.totalorder %s21, 1
    %p284 = por %p282, %p283
    %p286 = scmp.ne.s32.totalorder %s269, %s285
    %p287 = scmp.eq.s32.totalorder %s21, 0
    %p288 = por %p286, %p287
    %p289 = scmp.le.s32.totalorder 1, %s15
    %p290 = scmp.lt.s32.totalorder %s15, 3
    %p291 = pnand %p289, %p290
    %p292 = pneg %p291
    // Predicated region
    $region9: #{residual_block_nchw.1} parent=5 // pred_check
      _
    $region10: #{residual_block_nchw.1} parent=5 // pred_check_branch
      %294 = sbr.rel (%p291) target = $region12
    $region11: #{residual_block_nchw.1} parent=5 // pred_region
      %s295 = ssub.s32 %s15, 1
      // Predicated region
      $region13: #{residual_block_nchw.1} parent=11 // pred_check
        %p296 = pneg %p148
      $region14: #{residual_block_nchw.1} parent=11 // pred_check_branch
        %298 = sbr.rel (%p296) target = $region16
      $region15: #{residual_block_nchw.1} parent=11 // pred_region
        _
      $region16: #{residual_block_nchw.1} parent=11 // pred_fallthru
        _
      // Predicated region
      $region17: #{residual_block_nchw.1} parent=11 // pred_check
        %p299 = pneg %p169
      $region18: #{residual_block_nchw.1} parent=11 // pred_check_branch
        %301 = sbr.rel (%p299) target = $region20
      $region19: #{residual_block_nchw.1} parent=11 // pred_region
        _
      $region20: #{residual_block_nchw.1} parent=11 // pred_fallthru
        _
      // Predicated region
      $region21: #{residual_block_nchw.1} parent=11 // pred_check
        %p302 = pneg %p190
      $region22: #{residual_block_nchw.1} parent=11 // pred_check_branch
        %304 = sbr.rel (%p302) target = $region24
      $region23: #{residual_block_nchw.1} parent=11 // pred_region
        _
      $region24: #{residual_block_nchw.1} parent=11 // pred_fallthru
        _
      // Predicated region
      $region25: #{residual_block_nchw.1} parent=11 // pred_check
        %p305 = pneg %p211
      $region26: #{residual_block_nchw.1} parent=11 // pred_check_branch
        %307 = sbr.rel (%p305) target = $region28
      $region27: #{residual_block_nchw.1} parent=11 // pred_region
        _
      $region28: #{residual_block_nchw.1} parent=11 // pred_fallthru
        _
      // Predicated region
      $region29: #{residual_block_nchw.1} parent=11 // pred_check
        %p308 = pneg %p232
      $region30: #{residual_block_nchw.1} parent=11 // pred_check_branch
        %310 = sbr.rel (%p308) target = $region32
      $region31: #{residual_block_nchw.1} parent=11 // pred_region
        _
      $region32: #{residual_block_nchw.1} parent=11 // pred_fallthru
        _
      // Predicated region
      $region33: #{residual_block_nchw.1} parent=11 // pred_check
        %p311 = pneg %p253
      $region34: #{residual_block_nchw.1} parent=11 // pred_check_branch
        %313 = sbr.rel (%p311) target = $region36
      $region35: #{residual_block_nchw.1} parent=11 // pred_region
        _
      $region36: #{residual_block_nchw.1} parent=11 // pred_fallthru
        _
    $region12: #{residual_block_nchw.1} parent=5 // pred_fallthru
      _
    %p314 = scmp.lt.s32.totalorder %s15, 2
    // Predicated region
    $region37: #{residual_block_nchw.1} parent=5 // pred_check
      %p315 = pneg %p314
    $region38: #{residual_block_nchw.1} parent=5 // pred_check_branch
      %317 = sbr.rel (%p315) target = $region40
    $region39: #{residual_block_nchw.1} parent=5 // pred_region
      // Predicated region
      $region41: #{residual_block_nchw.1} parent=39 // pred_check
        %p318 = pneg %p49
      $region42: #{residual_block_nchw.1} parent=39 // pred_check_branch
        %320 = sbr.rel (%p318) target = $region44
      $region43: #{residual_block_nchw.1} parent=39 // pred_region
        %s321 = smul.u32 2, %s23
        %p322 = scmp.lt.s32.totalorder %s22, 1
        %s323 = scalar_select %p322, %s22, 1
        %p324 = scmp.lt.s32.totalorder %s321, 1
        %s325 = scalar_select %p324, %s321, 1
        %s326 = smul.addr %s323, 2
        %s327 = sadd.s32 %s325, %s326
        %s328 = smul.addr %s327, 4
        %s329 = scalar_lea.vmem %s0, %s328
        %s330 = smul.u32 2, %s23
      $region44: #{residual_block_nchw.1} parent=39 // pred_fallthru
        _
      // Predicated region
      $region45: #{residual_block_nchw.1} parent=39 // pred_check
        %p331 = pneg %p85
      $region46: #{residual_block_nchw.1} parent=39 // pred_check_branch
        %333 = sbr.rel (%p331) target = $region48
      $region47: #{residual_block_nchw.1} parent=39 // pred_region
        %s334 = smul.u32 %s23, 2
        %s335 = ssub.s32 %s334, 1
        %p336 = scmp.gt.s32.totalorder %s335, 0
        %s337 = scalar_select %p336, %s335, 0
        %p338 = scmp.lt.s32.totalorder %s22, 1
        %s339 = scalar_select %p338, %s22, 1
        %p340 = scmp.lt.s32.totalorder %s337, 1
        %s341 = scalar_select %p340, %s337, 1
        %s342 = smul.addr %s339, 2
        %s343 = sadd.s32 %s341, %s342
        %s344 = smul.addr %s343, 4
        %s345 = scalar_lea.vmem %s1, %s344
        %s346 = smul.u32 %s23, 2
        %s347 = ssub.s32 %s346, 1
        %p348 = scmp.gt.s32.totalorder %s347, 0
        %s349 = scalar_select %p348, %s347, 0
      $region48: #{residual_block_nchw.1} parent=39 // pred_fallthru
        _
      // Predicated region
      $region49: #{residual_block_nchw.1} parent=39 // pred_check
        %p350 = pneg %p121
      $region50: #{residual_block_nchw.1} parent=39 // pred_check_branch
        %352 = sbr.rel (%p350) target = $region52
      $region51: #{residual_block_nchw.1} parent=39 // pred_region
        %s353 = sadd.s32 %s23, 1
        %s354 = smul.u32 %s353, 2
        %p355 = scmp.lt.s32.totalorder %s354, 1
        %s356 = scalar_select %p355, %s354, 1
        %p357 = scmp.lt.s32.totalorder %s22, 1
        %s358 = scalar_select %p357, %s22, 1
        %p359 = scmp.lt.s32.totalorder %s356, 1
        %s360 = scalar_select %p359, %s356, 1
        %s361 = smul.addr %s358, 2
        %s362 = sadd.s32 %s360, %s361
        %s363 = smul.addr %s362, 4
        %s364 = scalar_lea.vmem %s2, %s363
        %s365 = sadd.s32 %s23, 1
        %s366 = smul.u32 %s365, 2
        %p367 = scmp.lt.s32.totalorder %s366, 1
        %s368 = scalar_select %p367, %s366, 1
      $region52: #{residual_block_nchw.1} parent=39 // pred_fallthru
        _
    $region40: #{residual_block_nchw.1} parent=5 // pred_fallthru
      _
    %p369 = scmp.le.s32.totalorder 1, %s15
    %p370 = scmp.lt.s32.totalorder %s15, 3
    %p371 = pnand %p369, %p370
    %p372 = pneg %p371
    // Predicated region
    $region53: #{residual_block_nchw.1} parent=5 // pred_check
      _
    $region54: #{residual_block_nchw.1} parent=5 // pred_check_branch
      %374 = sbr.rel (%p371) target = $region56
    $region55: #{residual_block_nchw.1} parent=5 // pred_region
      %s375 = ssub.s32 %s15, 1
      %s376 = smul.u32 2, %s25
      %p377 = scmp.lt.s32.totalorder %s24, 1
      %s378 = scalar_select %p377, %s24, 1
      %p379 = scmp.lt.s32.totalorder %s376, 1
      %s380 = scalar_select %p379, %s376, 1
      %s381 = smul.addr %s378, 2
      %s382 = sadd.s32 %s380, %s381
      %s383 = smul.addr %s382, 4
      %s384 = scalar_lea.vmem %s0, %s383
      %p385 = pneg %p55
      %p386 = pneg %p52
      %s387 = smul.u32 %s25, 2
      %s388 = ssub.s32 %s387, 1
      %p389 = scmp.gt.s32.totalorder %s388, 0
      %s390 = scalar_select %p389, %s388, 0
      %p391 = scmp.lt.s32.totalorder %s24, 1
      %s392 = scalar_select %p391, %s24, 1
      %p393 = scmp.lt.s32.totalorder %s390, 1
      %s394 = scalar_select %p393, %s390, 1
      %s395 = smul.addr %s392, 2
      %s396 = sadd.s32 %s394, %s395
      %s397 = smul.addr %s396, 4
      %s398 = scalar_lea.vmem %s1, %s397
      %p399 = pneg %p91
      %p400 = pneg %p88
      %s401 = sadd.s32 %s25, 1
      %s402 = smul.u32 %s401, 2
      %p403 = scmp.lt.s32.totalorder %s402, 1
      %s404 = scalar_select %p403, %s402, 1
      %p405 = scmp.lt.s32.totalorder %s24, 1
      %s406 = scalar_select %p405, %s24, 1
      %p407 = scmp.lt.s32.totalorder %s404, 1
      %s408 = scalar_select %p407, %s404, 1
      %s409 = smul.addr %s406, 2
      %s410 = sadd.s32 %s408, %s409
      %s411 = smul.addr %s410, 4
      %s412 = scalar_lea.vmem %s2, %s411
      %p413 = pneg %p127
      %p414 = pneg %p124
      %p415 = pneg %p148
      %p416 = pneg %p145
      %p417 = pneg %p169
      %p418 = pneg %p166
      %p419 = pneg %p190
      %p420 = pneg %p187
      %p421 = pneg %p211
      %p422 = pneg %p208
      %p423 = pneg %p232
      %p424 = pneg %p229
      %p425 = pneg %p253
      %p426 = pneg %p250
      %p427 = pneg %p281
      %p428 = pneg %p278
      %s429 = smul.u32 2, %s25
      %p430 = scmp.lt.s32.totalorder %s24, 1
      %s431 = scalar_select %p430, %s24, 1
      %p432 = scmp.lt.s32.totalorder %s429, 1
      %s433 = scalar_select %p432, %s429, 1
      %s434 = smul.addr %s431, 2
      %s435 = sadd.s32 %s433, %s434
      %s436 = smul.addr %s435, 4
      %s437 = scalar_lea.vmem %s9, %s436
      %s438 = smul.u32 2, %s25
      %p439 = scmp.lt.s32.totalorder %s24, 1
      %s440 = scalar_select %p439, %s24, 1
      %p441 = scmp.lt.s32.totalorder %s438, 1
      %s442 = scalar_select %p441, %s438, 1
      %s443 = smul.addr %s440, 2
      %s444 = sadd.s32 %s442, %s443
      %s445 = smul.addr %s444, 4
      %s446 = scalar_lea.vmem %s0, %s445
      %s447 = smul.u32 2, %s25
      %s448 = smul.u32 %s25, 2
      %s449 = ssub.s32 %s448, 1
      %p450 = scmp.gt.s32.totalorder %s449, 0
      %s451 = scalar_select %p450, %s449, 0
      %p452 = scmp.lt.s32.totalorder %s24, 1
      %s453 = scalar_select %p452, %s24, 1
      %p454 = scmp.lt.s32.totalorder %s451, 1
      %s455 = scalar_select %p454, %s451, 1
      %s456 = smul.addr %s453, 2
      %s457 = sadd.s32 %s455, %s456
      %s458 = smul.addr %s457, 4
      %s459 = scalar_lea.vmem %s1, %s458
      %s460 = smul.u32 %s25, 2
      %s461 = ssub.s32 %s460, 1
      %p462 = scmp.gt.s32.totalorder %s461, 0
      %s463 = scalar_select %p462, %s461, 0
      %s464 = sadd.s32 %s25, 1
      %s465 = smul.u32 %s464, 2
      %p466 = scmp.lt.s32.totalorder %s465, 1
      %s467 = scalar_select %p466, %s465, 1
      %p468 = scmp.lt.s32.totalorder %s24, 1
      %s469 = scalar_select %p468, %s24, 1
      %p470 = scmp.lt.s32.totalorder %s467, 1
      %s471 = scalar_select %p470, %s467, 1
      %s472 = smul.addr %s469, 2
      %s473 = sadd.s32 %s471, %s472
      %s474 = smul.addr %s473, 4
      %s475 = scalar_lea.vmem %s2, %s474
      %s476 = sadd.s32 %s25, 1
      %s477 = smul.u32 %s476, 2
      %p478 = scmp.lt.s32.totalorder %s477, 1
      %s479 = scalar_select %p478, %s477, 1
      %s480 = smul.u32 2, %s25
      %p481 = scmp.lt.s32.totalorder %s24, 1
      %s482 = scalar_select %p481, %s24, 1
      %p483 = scmp.lt.s32.totalorder %s480, 1
      %s484 = scalar_select %p483, %s480, 1
      %s485 = smul.addr %s482, 2
      %s486 = sadd.s32 %s484, %s485
      %s487 = smul.addr %s486, 4
      %s488 = scalar_lea.vmem %s9, %s487
      %s489 = smul.u32 2, %s25
      %p490 = scmp.gt.s32.totalorder %s25, 0
      %s491 = scalar_select %p490, 1, 0
      %s492 = scvt.s32.f32 %s491
      %p493 = scmp.lt.s32.totalorder %s25, 0
      %s494 = scalar_select %p493, 1, 0
      %s495 = scvt.s32.f32 %s494
      %v496 = vld [vmem:[%s446] sm:$0xff]
      %v497 = vld [vmem:[%s459] sm:$0xf]
      %v498 = vstv %s492
      %v499 = vmul.f32 %v497, %v498
      %v500 = vld [vmem:[%s475] sm:$0xf]
      %v501 = vstv %s495
      %v502 = vmul.f32 %v500, %v501
      %504 = vrot.lane.b32.xlu0 %v499, 32
      %v505 = vpop.permute.xlu0 %504
      %508 = vst [vmem:[#allocation1] ss:$2 sm:$0xff] %v496
      %v509 = vld.sshfl [vmem:[#allocation1] sm:$0xff pattern:$0x75316420]
      %v510 = vld.sshfl [vmem:[#allocation1 + $0x8] sm:$0xff pattern:$0x75316420]
      %511 = vrot.lane.b32.xlu0 %v509, 32
      %v512 = vpop.permute.xlu0 %511
      %513 = vrot.lane.b32.xlu0 %v510, 32
      %v514 = vpop.permute.xlu0 %513
      %vm515 = vcmask 261120
      %v516 = vsel %vm515, %v512, %v514
      %520 = vrot.lane.b32.xlu0 %v502, 32
      %v521 = vpop.permute.xlu0 %520
      %v523 = vsel %vm515, %v505, %v512
      %v524 = vsel %vm515, %v514, %v521
      %v525 = vlaneseq
      %v526 = vand.u32 %v525, 127
      %v527 = vrot.slane %v526, 4
      %vm528 = vcmask 1047556
      %v529 = vsel %vm528, 0, %v527
      %v531 = vunpack.c.l.s4 1983009808
      %v532 = vunpack.c.0.s8 %v531
      %v533 = vperm.slane %v526, %v532
      %v535 = vunpack.c.l.s4 1983009808
      %v536 = vunpack.c.0.s8 %v535
      %v537 = vperm.slane %v529, %v536
      %v538 = vrot.slane %v533, 4
      %v539 = vsel %vm528, 0, %v538
      %v541 = vunpack.c.l.s4 1934713408
      %v542 = vunpack.c.0.s8 %v541
      %v543 = vperm.slane %v533, %v542
      %v545 = vunpack.c.l.s4 1934713408
      %v546 = vunpack.c.0.s8 %v545
      %v547 = vperm.slane %v539, %v546
      %v548 = vrot.slane %v537, 4
      %v549 = vsel %vm528, 0, %v548
      %v551 = vunpack.c.l.s4 1934713408
      %v552 = vunpack.c.0.s8 %v551
      %v553 = vperm.slane %v537, %v552
      %v555 = vunpack.c.l.s4 1934713408
      %v556 = vunpack.c.0.s8 %v555
      %v557 = vperm.slane %v549, %v556
      %v558 = vrot.slane %v543, 4
      %v559 = vsel %vm528, 0, %v558
      %v560 = vrot.slane %v547, 4
      %v561 = vsel %vm528, 0, %v560
      %v562 = vrot.slane %v553, 4
      %v563 = vsel %vm528, 0, %v562
      %v564 = vrot.slane %v557, 4
      %v565 = vsel %vm528, 0, %v564
      %566 = vrot.lane.b32.xlu0 %v559, 16
      %v567 = vpop.permute.xlu0 %566
      %568 = vrot.lane.b32.xlu0 %v547, 32
      %v569 = vpop.permute.xlu0 %568
      %570 = vrot.lane.b32.xlu0 %v561, 48
      %v571 = vpop.permute.xlu0 %570
      %572 = vrot.lane.b32.xlu0 %v553, 64
      %v573 = vpop.permute.xlu0 %572
      %574 = vrot.lane.b32.xlu0 %v563, 80
      %v575 = vpop.permute.xlu0 %574
      %576 = vrot.lane.b32.xlu0 %v557, 96
      %v577 = vpop.permute.xlu0 %576
      %578 = vrot.lane.b32.xlu0 %v565, 112
      %v579 = vpop.permute.xlu0 %578
      %vm580 = vcmask 130048
      %v581 = vsel %vm580, %v543, %v567
      %v582 = vsel %vm515, %v581, %v569
      %vm583 = vcmask 392192
      %v584 = vsel %vm583, %v582, %v571
      %vm585 = vcmask 523264
      %v586 = vsel %vm585, %v584, %v573
      %vm587 = vcmask 654336
      %v588 = vsel %vm587, %v586, %v575
      %vm589 = vcmask 785408
      %v590 = vsel %vm589, %v588, %v577
      %vm591 = vcmask 916480
      %v592 = vsel %vm591, %v590, %v579
      %v593 = vlaneseq
      %v594 = vshrl.u32 %v593, 7
      %v595 = vadd.s32 %v594, 8
      %v596 = vrot.slane %v594, 4
      %v597 = vsel %vm528, 0, %v596
      %v599 = vunpack.c.l.s4 1983009808
      %v600 = vunpack.c.0.s8 %v599
      %v601 = vperm.slane %v594, %v600
      %v603 = vunpack.c.l.s4 1983009808
      %v604 = vunpack.c.0.s8 %v603
      %v605 = vperm.slane %v597, %v604
      %v606 = vrot.slane %v601, 4
      %v607 = vsel %vm528, 0, %v606
      %v609 = vunpack.c.l.s4 1934713408
      %v610 = vunpack.c.0.s8 %v609
      %v611 = vperm.slane %v601, %v610
      %v613 = vunpack.c.l.s4 1934713408
      %v614 = vunpack.c.0.s8 %v613
      %v615 = vperm.slane %v607, %v614
      %v616 = vrot.slane %v605, 4
      %v617 = vsel %vm528, 0, %v616
      %v619 = vunpack.c.l.s4 1934713408
      %v620 = vunpack.c.0.s8 %v619
      %v621 = vperm.slane %v605, %v620
      %v623 = vunpack.c.l.s4 1934713408
      %v624 = vunpack.c.0.s8 %v623
      %v625 = vperm.slane %v617, %v624
      %v626 = vrot.slane %v611, 4
      %v627 = vsel %vm528, 0, %v626
      %v628 = vrot.slane %v615, 4
      %v629 = vsel %vm528, 0, %v628
      %v630 = vrot.slane %v621, 4
      %v631 = vsel %vm528, 0, %v630
      %v632 = vrot.slane %v625, 4
      %v633 = vsel %vm528, 0, %v632
      %v634 = vrot.slane %v595, 4
      %v635 = vsel %vm528, 0, %v634
      %v637 = vunpack.c.l.s4 1983009808
      %v638 = vunpack.c.0.s8 %v637
      %v639 = vperm.slane %v595, %v638
      %v641 = vunpack.c.l.s4 1983009808
      %v642 = vunpack.c.0.s8 %v641
      %v643 = vperm.slane %v635, %v642
      %v644 = vrot.slane %v639, 4
      %v645 = vsel %vm528, 0, %v644
      %v647 = vunpack.c.l.s4 1934713408
      %v648 = vunpack.c.0.s8 %v647
      %v649 = vperm.slane %v639, %v648
      %v651 = vunpack.c.l.s4 1934713408
      %v652 = vunpack.c.0.s8 %v651
      %v653 = vperm.slane %v645, %v652
      %v654 = vrot.slane %v643, 4
      %v655 = vsel %vm528, 0, %v654
      %v657 = vunpack.c.l.s4 1934713408
      %v658 = vunpack.c.0.s8 %v657
      %v659 = vperm.slane %v643, %v658
      %v661 = vunpack.c.l.s4 1934713408
      %v662 = vunpack.c.0.s8 %v661
      %v663 = vperm.slane %v655, %v662
      %v664 = vrot.slane %v649, 4
      %v665 = vsel %vm528, 0, %v664
      %v666 = vrot.slane %v653, 4
      %v667 = vsel %vm528, 0, %v666
      %v668 = vrot.slane %v659, 4
      %v669 = vsel %vm528, 0, %v668
      %v670 = vrot.slane %v663, 4
      %v671 = vsel %vm528, 0, %v670
      %v672 = vadd.s32 %v594, 16
      %v674 = vunpack.c.l.s4 1983009808
      %v675 = vunpack.c.0.s8 %v674
      %v676 = vperm.slane %v672, %v675
      %v677 = vrot.slane %v676, 4
      %v678 = vsel %vm528, 0, %v677
      %v680 = vunpack.c.l.s4 1934713408
      %v681 = vunpack.c.0.s8 %v680
      %v682 = vperm.slane %v676, %v681
      %v684 = vunpack.c.l.s4 1934713408
      %v685 = vunpack.c.0.s8 %v684
      %v686 = vperm.slane %v678, %v685
      %v687 = vrot.slane %v682, 4
      %v688 = vsel %vm528, 0, %v687
      %v689 = vrot.slane %v686, 4
      %v690 = vsel %vm528, 0, %v689
      %691 = vrot.lane.b32.xlu0 %v627, 16
      %v692 = vpop.permute.xlu0 %691
      %693 = vrot.lane.b32.xlu0 %v615, 32
      %v694 = vpop.permute.xlu0 %693
      %695 = vrot.lane.b32.xlu0 %v629, 48
      %v696 = vpop.permute.xlu0 %695
      %697 = vrot.lane.b32.xlu0 %v621, 64
      %v698 = vpop.permute.xlu0 %697
      %699 = vrot.lane.b32.xlu0 %v631, 80
      %v700 = vpop.permute.xlu0 %699
      %701 = vrot.lane.b32.xlu0 %v625, 96
      %v702 = vpop.permute.xlu0 %701
      %703 = vrot.lane.b32.xlu0 %v633, 112
      %v704 = vpop.permute.xlu0 %703
      %705 = vrot.lane.b32.xlu0 %v665, 16
      %v706 = vpop.permute.xlu0 %705
      %707 = vrot.lane.b32.xlu0 %v653, 32
      %v708 = vpop.permute.xlu0 %707
      %709 = vrot.lane.b32.xlu0 %v667, 48
      %v710 = vpop.permute.xlu0 %709
      %711 = vrot.lane.b32.xlu0 %v659, 64
      %v712 = vpop.permute.xlu0 %711
      %713 = vrot.lane.b32.xlu0 %v669, 80
      %v714 = vpop.permute.xlu0 %713
      %715 = vrot.lane.b32.xlu0 %v663, 96
      %v716 = vpop.permute.xlu0 %715
      %717 = vrot.lane.b32.xlu0 %v671, 112
      %v718 = vpop.permute.xlu0 %717
      %719 = vrot.lane.b32.xlu0 %v688, 16
      %v720 = vpop.permute.xlu0 %719
      %721 = vrot.lane.b32.xlu0 %v686, 32
      %v722 = vpop.permute.xlu0 %721
      %723 = vrot.lane.b32.xlu0 %v690, 48
      %v724 = vpop.permute.xlu0 %723
      %v725 = vsel %vm580, %v611, %v692
      %v726 = vsel %vm515, %v725, %v694
      %v727 = vsel %vm583, %v726, %v696
      %v728 = vsel %vm585, %v727, %v698
      %v729 = vsel %vm587, %v728, %v700
      %v730 = vsel %vm589, %v729, %v702
      %v731 = vsel %vm591, %v730, %v704
      %v732 = vsel %vm580, %v649, %v706
      %v733 = vsel %vm515, %v732, %v708
      %v734 = vsel %vm583, %v733, %v710
      %v735 = vsel %vm585, %v734, %v712
      %v736 = vsel %vm587, %v735, %v714
      %v737 = vsel %vm589, %v736, %v716
      %v738 = vsel %vm591, %v737, %v718
      %v739 = vsel %vm580, %v682, %v720
      %v740 = vsel %vm515, %v739, %v722
      %v741 = vsel %vm583, %v740, %v724
      %vm742 = vcmp.ne.s32.totalorder %v592, 0
      %vm743 = vcmp.ne.s32.totalorder %v584, 0
      %v744 = vsel %vm742, 1, 0
      %v745 = vsel %vm743, 1, 0
      %v746 = vcvt.s32.f32 %v744
      %v747 = vcvt.s32.f32 %v745
      %vm748 = vcmp.ne.s32.totalorder %v592, 15
      %vm749 = vcmp.ne.s32.totalorder %v584, 15
      %v750 = vsel %vm748, 1, 0
      %v751 = vsel %vm749, 1, 0
      %v752 = vcvt.s32.f32 %v750
      %v753 = vcvt.s32.f32 %v751
      %vm754 = vcmp.ge.s32.totalorder %v731, 1
      %vm755 = vcmp.ge.s32.totalorder %v738, 1
      %vm756 = vcmp.ge.s32.totalorder %v741, 1
      %vm757 = vcmp.le.s32.totalorder %v731, 18
      %vm758 = vcmp.le.s32.totalorder %v738, 18
      %vm759 = vcmp.le.s32.totalorder %v741, 18
      %vm760 = vmand %vm754, %vm757
      %vm761 = vmand %vm755, %vm758
      %vm762 = vmand %vm756, %vm759
      %vm763 = vcmp.ge.s32.totalorder %v731, 2
      %vm764 = vcmp.ge.s32.totalorder %v738, 2
      %vm765 = vcmp.ge.s32.totalorder %v741, 2
      %v766 = vstv %s491
      %vm767 = vcmp.eq.s32.totalorder %v766, 1
      %vm768 = vmor %vm767, %vm763
      %vm769 = vmor %vm767, %vm764
      %vm770 = vmor %vm767, %vm765
      %vm771 = vcmp.le.s32.totalorder %v731, 17
      %vm772 = vcmp.le.s32.totalorder %v738, 17
      %vm773 = vcmp.le.s32.totalorder %v741, 17
      %v774 = vstv %s494
      %vm775 = vcmp.eq.s32.totalorder %v774, 1
      %vm776 = vmor %vm775, %vm771
      %vm777 = vmor %vm775, %vm772
      %vm778 = vmor %vm775, %vm773
      %vm779 = vmand %vm768, %vm776
      %vm780 = vmand %vm769, %vm777
      %vm781 = vmand %vm770, %vm778
      %vm782 = vmand %vm760, %vm779
      %vm783 = vmand %vm761, %vm780
      %vm784 = vmand %vm762, %vm781
      %v785 = vsel %vm782, 1, 0
      %v786 = vsel %vm783, 1, 0
      %v787 = vsel %vm784, 1, 0
      %v788 = vcvt.s32.f32 %v785
      %v789 = vcvt.s32.f32 %v786
      %v790 = vcvt.s32.f32 %v787
      %793 = vrot.lane.b32.xlu0 %v523, 17
      %v794 = vpop.permute.xlu0 %793
      %795 = vrot.lane.b32.xlu0 %v516, 17
      %v796 = vpop.permute.xlu0 %795
      %797 = vrot.lane.b32.xlu0 %v524, 17
      %v798 = vpop.permute.xlu0 %797
      %vm799 = vcmask 138240
      %v800 = vsel %vm799, %v794, %v796
      %v801 = vsel %vm799, %v796, %v798
      %v805 = vsel %vm799, 0.0, %v794
      %v806 = vperm.slane %v746, 0
      %v807 = vperm.slane %v747, 0
      %v808 = vmul.f32 %v805, %v806
      %v809 = vmul.f32 %v800, %v806
      %v810 = vmul.f32 %v801, %v807
      %v811 = vld [vmem:[%s3] sm:$0xf]
      %812 = vrot.lane.b32.xlu0 %v523, 16
      %v813 = vpop.permute.xlu0 %812
      %814 = vrot.lane.b32.xlu0 %v516, 16
      %v815 = vpop.permute.xlu0 %814
      %816 = vrot.lane.b32.xlu0 %v524, 16
      %v817 = vpop.permute.xlu0 %816
      %v818 = vsel %vm580, %v813, %v815
      %v819 = vsel %vm580, %v815, %v817
      %v821 = vsel %vm580, 0.0, %v813
      %s822 = scalar_lea.vmem %s3, 4
      %v823 = vld [vmem:[%s822] sm:$0xf]
      %vm824 = vcmask 31744
      %v826 = vsel %vm824, %v823, 0
      %vm828 = vcmask 1043456
      %v830 = vsel %vm828, %v821, 0
      %v832 = vsel %vm828, %v818, 0
      %v834 = vsel %vm828, %v819, 0
      %836 = vmatpush.msra.mxu0 0.0
      %837 = vmatpush.msra.mxu0 0.0
      %838 = vmatpush.msra.mxu0 0.0
      %839 = vmatpush.msra.mxu0 0.0
      %840 = vmatpush.msra.mxu0 0.0
      %841 = vmatpush.msra.mxu0 0.0
      %842 = vmatpush.msra.mxu0 0.0
      %843 = vmatpush.msra.mxu0 0.0
      %844 = vmatpush.msra.mxu0 0.0
      %845 = vmatpush.msra.mxu0 0.0
      %846 = vmatpush.msra.mxu0 0.0
      %847 = vmatpush.msra.mxu0 0.0
      %848 = vmatpush.msra.mxu0 0.0
      %849 = vmatpush.msra.mxu0 0.0
      %850 = vmatpush.msra.mxu0 0.0
      %851 = vmatpush.msra.mxu0 %v830
      %852 = vmatmul.f32.gmra.mxu0 %v826
      %v853 = vpop.f32.mrf.mxu0
      %v854 = vadd.f32 0.0, %v853
      %855 = vdwg.mxu0
      %856 = vmatpush.msra.mxu0 0.0
      %857 = vmatpush.msra.mxu0 0.0
      %858 = vmatpush.msra.mxu0 0.0
      %859 = vmatpush.msra.mxu0 0.0
      %860 = vmatpush.msra.mxu0 0.0
      %861 = vmatpush.msra.mxu0 0.0
      %862 = vmatpush.msra.mxu0 0.0
      %863 = vmatpush.msra.mxu0 0.0
      %864 = vmatpush.msra.mxu0 0.0
      %865 = vmatpush.msra.mxu0 0.0
      %866 = vmatpush.msra.mxu0 0.0
      %867 = vmatpush.msra.mxu0 0.0
      %868 = vmatpush.msra.mxu0 0.0
      %869 = vmatpush.msra.mxu0 0.0
      %870 = vmatpush.msra.mxu0 0.0
      %871 = vmatpush.msra.mxu0 %v832
      %872 = vmatmul.f32.gmra.mxu0 %v826
      %v873 = vpop.f32.mrf.mxu0
      %v874 = vadd.f32 0.0, %v873
      %875 = vdwg.mxu0
      %876 = vmatpush.msra.mxu0 0.0
      %877 = vmatpush.msra.mxu0 0.0
      %878 = vmatpush.msra.mxu0 0.0
      %879 = vmatpush.msra.mxu0 0.0
      %880 = vmatpush.msra.mxu0 0.0
      %881 = vmatpush.msra.mxu0 0.0
      %882 = vmatpush.msra.mxu0 0.0
      %883 = vmatpush.msra.mxu0 0.0
      %884 = vmatpush.msra.mxu0 0.0
      %885 = vmatpush.msra.mxu0 0.0
      %886 = vmatpush.msra.mxu0 0.0
      %887 = vmatpush.msra.mxu0 0.0
      %888 = vmatpush.msra.mxu0 0.0
      %889 = vmatpush.msra.mxu0 0.0
      %890 = vmatpush.msra.mxu0 0.0
      %891 = vmatpush.msra.mxu0 %v834
      %892 = vmatmul.f32.gmra.mxu0 %v826
      %v893 = vpop.f32.mrf.mxu0
      %v894 = vadd.f32 0.0, %v893
      %895 = vdwg.mxu0
      %v897 = vsel %vm824, %v811, 0
      %v900 = vsel %vm828, %v808, 0
      %v903 = vsel %vm828, %v809, 0
      %v906 = vsel %vm828, %v810, 0
      %908 = vmatpush.msra.mxu0 0.0
      %909 = vmatpush.msra.mxu0 0.0
      %910 = vmatpush.msra.mxu0 0.0
      %911 = vmatpush.msra.mxu0 0.0
      %912 = vmatpush.msra.mxu0 0.0
      %913 = vmatpush.msra.mxu0 0.0
      %914 = vmatpush.msra.mxu0 0.0
      %915 = vmatpush.msra.mxu0 0.0
      %916 = vmatpush.msra.mxu0 0.0
      %917 = vmatpush.msra.mxu0 0.0
      %918 = vmatpush.msra.mxu0 0.0
      %919 = vmatpush.msra.mxu0 0.0
      %920 = vmatpush.msra.mxu0 0.0
      %921 = vmatpush.msra.mxu0 0.0
      %922 = vmatpush.msra.mxu0 0.0
      %923 = vmatpush.msra.mxu0 %v900
      %924 = vmatmul.f32.gmra.mxu0 %v897
      %v925 = vpop.f32.mrf.mxu0
      %v926 = vadd.f32 %v854, %v925
      %927 = vdwg.mxu0
      %928 = vmatpush.msra.mxu0 0.0
      %929 = vmatpush.msra.mxu0 0.0
      %930 = vmatpush.msra.mxu0 0.0
      %931 = vmatpush.msra.mxu0 0.0
      %932 = vmatpush.msra.mxu0 0.0
      %933 = vmatpush.msra.mxu0 0.0
      %934 = vmatpush.msra.mxu0 0.0
      %935 = vmatpush.msra.mxu0 0.0
      %936 = vmatpush.msra.mxu0 0.0
      %937 = vmatpush.msra.mxu0 0.0
      %938 = vmatpush.msra.mxu0 0.0
      %939 = vmatpush.msra.mxu0 0.0
      %940 = vmatpush.msra.mxu0 0.0
      %941 = vmatpush.msra.mxu0 0.0
      %942 = vmatpush.msra.mxu0 0.0
      %943 = vmatpush.msra.mxu0 %v903
      %944 = vmatmul.f32.gmra.mxu0 %v897
      %v945 = vpop.f32.mrf.mxu0
      %v946 = vadd.f32 %v874, %v945
      %947 = vdwg.mxu0
      %948 = vmatpush.msra.mxu0 0.0
      %949 = vmatpush.msra.mxu0 0.0
      %950 = vmatpush.msra.mxu0 0.0
      %951 = vmatpush.msra.mxu0 0.0
      %952 = vmatpush.msra.mxu0 0.0
      %953 = vmatpush.msra.mxu0 0.0
      %954 = vmatpush.msra.mxu0 0.0
      %955 = vmatpush.msra.mxu0 0.0
      %956 = vmatpush.msra.mxu0 0.0
      %957 = vmatpush.msra.mxu0 0.0
      %958 = vmatpush.msra.mxu0 0.0
      %959 = vmatpush.msra.mxu0 0.0
      %960 = vmatpush.msra.mxu0 0.0
      %961 = vmatpush.msra.mxu0 0.0
      %962 = vmatpush.msra.mxu0 0.0
      %963 = vmatpush.msra.mxu0 %v906
      %964 = vmatmul.f32.gmra.mxu0 %v897
      %v965 = vpop.f32.mrf.mxu0
      %v966 = vadd.f32 %v894, %v965
      %967 = vdwg.mxu0
      %968 = vrot.lane.b32.xlu0 %v523, 15
      %v969 = vpop.permute.xlu0 %968
      %970 = vrot.lane.b32.xlu0 %v516, 15
      %v971 = vpop.permute.xlu0 %970
      %972 = vrot.lane.b32.xlu0 %v524, 15
      %v973 = vpop.permute.xlu0 %972
      %vm974 = vcmask 121856
      %v975 = vsel %vm974, %v969, %v971
      %v976 = vsel %vm974, %v971, %v973
      %v980 = vsel %vm974, 0.0, %v969
      %v981 = vperm.slane %v752, 0
      %v982 = vperm.slane %v753, 0
      %v983 = vmul.f32 %v980, %v981
      %v984 = vmul.f32 %v975, %v981
      %v985 = vmul.f32 %v976, %v982
      %s986 = scalar_lea.vmem %s3, 8
      %v987 = vld [vmem:[%s986] sm:$0xf]
      %v989 = vsel %vm824, %v987, 0
      %v992 = vsel %vm828, %v983, 0
      %v995 = vsel %vm828, %v984, 0
      %v998 = vsel %vm828, %v985, 0
      %1000 = vmatpush.msra.mxu0 0.0
      %1001 = vmatpush.msra.mxu0 0.0
      %1002 = vmatpush.msra.mxu0 0.0
      %1003 = vmatpush.msra.mxu0 0.0
      %1004 = vmatpush.msra.mxu0 0.0
      %1005 = vmatpush.msra.mxu0 0.0
      %1006 = vmatpush.msra.mxu0 0.0
      %1007 = vmatpush.msra.mxu0 0.0
      %1008 = vmatpush.msra.mxu0 0.0
      %1009 = vmatpush.msra.mxu0 0.0
      %1010 = vmatpush.msra.mxu0 0.0
      %1011 = vmatpush.msra.mxu0 0.0
      %1012 = vmatpush.msra.mxu0 0.0
      %1013 = vmatpush.msra.mxu0 0.0
      %1014 = vmatpush.msra.mxu0 0.0
      %1015 = vmatpush.msra.mxu0 %v992
      %1016 = vmatmul.f32.gmra.mxu0 %v989
      %v1017 = vpop.f32.mrf.mxu0
      %v1018 = vadd.f32 0.0, %v1017
      %1019 = vdwg.mxu0
      %1020 = vmatpush.msra.mxu0 0.0
      %1021 = vmatpush.msra.mxu0 0.0
      %1022 = vmatpush.msra.mxu0 0.0
      %1023 = vmatpush.msra.mxu0 0.0
      %1024 = vmatpush.msra.mxu0 0.0
      %1025 = vmatpush.msra.mxu0 0.0
      %1026 = vmatpush.msra.mxu0 0.0
      %1027 = vmatpush.msra.mxu0 0.0
      %1028 = vmatpush.msra.mxu0 0.0
      %1029 = vmatpush.msra.mxu0 0.0
      %1030 = vmatpush.msra.mxu0 0.0
      %1031 = vmatpush.msra.mxu0 0.0
      %1032 = vmatpush.msra.mxu0 0.0
      %1033 = vmatpush.msra.mxu0 0.0
      %1034 = vmatpush.msra.mxu0 0.0
      %1035 = vmatpush.msra.mxu0 %v995
      %1036 = vmatmul.f32.gmra.mxu0 %v989
      %v1037 = vpop.f32.mrf.mxu0
      %v1038 = vadd.f32 0.0, %v1037
      %1039 = vdwg.mxu0
      %1040 = vmatpush.msra.mxu0 0.0
      %1041 = vmatpush.msra.mxu0 0.0
      %1042 = vmatpush.msra.mxu0 0.0
      %1043 = vmatpush.msra.mxu0 0.0
      %1044 = vmatpush.msra.mxu0 0.0
      %1045 = vmatpush.msra.mxu0 0.0
      %1046 = vmatpush.msra.mxu0 0.0
      %1047 = vmatpush.msra.mxu0 0.0
      %1048 = vmatpush.msra.mxu0 0.0
      %1049 = vmatpush.msra.mxu0 0.0
      %1050 = vmatpush.msra.mxu0 0.0
      %1051 = vmatpush.msra.mxu0 0.0
      %1052 = vmatpush.msra.mxu0 0.0
      %1053 = vmatpush.msra.mxu0 0.0
      %1054 = vmatpush.msra.mxu0 0.0
      %1055 = vmatpush.msra.mxu0 %v998
      %1056 = vmatmul.f32.gmra.mxu0 %v989
      %v1057 = vpop.f32.mrf.mxu0
      %v1058 = vadd.f32 0.0, %v1057
      %1059 = vdwg.mxu0
      %v1060 = vadd.f32 %v926, %v1018
      %v1061 = vadd.f32 %v946, %v1038
      %v1062 = vadd.f32 %v966, %v1058
      %1063 = vrot.lane.b32.xlu0 %v523, 1
      %v1064 = vpop.permute.xlu0 %1063
      %1065 = vrot.lane.b32.xlu0 %v516, 1
      %v1066 = vpop.permute.xlu0 %1065
      %1067 = vrot.lane.b32.xlu0 %v524, 1
      %v1068 = vpop.permute.xlu0 %1067
      %vm1069 = vcmask 7168
      %v1070 = vsel %vm1069, %v1064, %v1066
      %v1071 = vsel %vm1069, %v1066, %v1068
      %v1075 = vsel %vm1069, 0.0, %v1064
      %v1076 = vmul.f32 %v1075, %v806
      %v1077 = vmul.f32 %v1070, %v806
      %v1078 = vmul.f32 %v1071, %v807
      %s1079 = scalar_lea.vmem %s3, 12
      %v1080 = vld [vmem:[%s1079] sm:$0xf]
      %v1082 = vsel %vm824, %v1080, 0
      %v1085 = vsel %vm828, %v1076, 0
      %v1088 = vsel %vm828, %v1077, 0
      %v1091 = vsel %vm828, %v1078, 0
      %1093 = vmatpush.msra.mxu0 0.0
      %1094 = vmatpush.msra.mxu0 0.0
      %1095 = vmatpush.msra.mxu0 0.0
      %1096 = vmatpush.msra.mxu0 0.0
      %1097 = vmatpush.msra.mxu0 0.0
      %1098 = vmatpush.msra.mxu0 0.0
      %1099 = vmatpush.msra.mxu0 0.0
      %1100 = vmatpush.msra.mxu0 0.0
      %1101 = vmatpush.msra.mxu0 0.0
      %1102 = vmatpush.msra.mxu0 0.0
      %1103 = vmatpush.msra.mxu0 0.0
      %1104 = vmatpush.msra.mxu0 0.0
      %1105 = vmatpush.msra.mxu0 0.0
      %1106 = vmatpush.msra.mxu0 0.0
      %1107 = vmatpush.msra.mxu0 0.0
      %1108 = vmatpush.msra.mxu0 %v1085
      %1109 = vmatmul.f32.gmra.mxu0 %v1082
      %v1110 = vpop.f32.mrf.mxu0
      %v1111 = vadd.f32 0.0, %v1110
      %1112 = vdwg.mxu0
      %1113 = vmatpush.msra.mxu0 0.0
      %1114 = vmatpush.msra.mxu0 0.0
      %1115 = vmatpush.msra.mxu0 0.0
      %1116 = vmatpush.msra.mxu0 0.0
      %1117 = vmatpush.msra.mxu0 0.0
      %1118 = vmatpush.msra.mxu0 0.0
      %1119 = vmatpush.msra.mxu0 0.0
      %1120 = vmatpush.msra.mxu0 0.0
      %1121 = vmatpush.msra.mxu0 0.0
      %1122 = vmatpush.msra.mxu0 0.0
      %1123 = vmatpush.msra.mxu0 0.0
      %1124 = vmatpush.msra.mxu0 0.0
      %1125 = vmatpush.msra.mxu0 0.0
      %1126 = vmatpush.msra.mxu0 0.0
      %1127 = vmatpush.msra.mxu0 0.0
      %1128 = vmatpush.msra.mxu0 %v1088
      %1129 = vmatmul.f32.gmra.mxu0 %v1082
      %v1130 = vpop.f32.mrf.mxu0
      %v1131 = vadd.f32 0.0, %v1130
      %1132 = vdwg.mxu0
      %1133 = vmatpush.msra.mxu0 0.0
      %1134 = vmatpush.msra.mxu0 0.0
      %1135 = vmatpush.msra.mxu0 0.0
      %1136 = vmatpush.msra.mxu0 0.0
      %1137 = vmatpush.msra.mxu0 0.0
      %1138 = vmatpush.msra.mxu0 0.0
      %1139 = vmatpush.msra.mxu0 0.0
      %1140 = vmatpush.msra.mxu0 0.0
      %1141 = vmatpush.msra.mxu0 0.0
      %1142 = vmatpush.msra.mxu0 0.0
      %1143 = vmatpush.msra.mxu0 0.0
      %1144 = vmatpush.msra.mxu0 0.0
      %1145 = vmatpush.msra.mxu0 0.0
      %1146 = vmatpush.msra.mxu0 0.0
      %1147 = vmatpush.msra.mxu0 0.0
      %1148 = vmatpush.msra.mxu0 %v1091
      %1149 = vmatmul.f32.gmra.mxu0 %v1082
      %v1150 = vpop.f32.mrf.mxu0
      %v1151 = vadd.f32 0.0, %v1150
      %1152 = vdwg.mxu0
      %v1153 = vadd.f32 %v1060, %v1111
      %v1154 = vadd.f32 %v1061, %v1131
      %v1155 = vadd.f32 %v1062, %v1151
      %s1156 = scalar_lea.vmem %s3, 16
      %v1157 = vld [vmem:[%s1156] sm:$0xf]
      %v1159 = vsel %vm824, %v1157, 0
      %v1161 = vsel %vm828, %v523, 0
      %v1163 = vsel %vm828, %v516, 0
      %v1165 = vsel %vm828, %v524, 0
      %1167 = vmatpush.msra.mxu0 0.0
      %1168 = vmatpush.msra.mxu0 0.0
      %1169 = vmatpush.msra.mxu0 0.0
      %1170 = vmatpush.msra.mxu0 0.0
      %1171 = vmatpush.msra.mxu0 0.0
      %1172 = vmatpush.msra.mxu0 0.0
      %1173 = vmatpush.msra.mxu0 0.0
      %1174 = vmatpush.msra.mxu0 0.0
      %1175 = vmatpush.msra.mxu0 0.0
      %1176 = vmatpush.msra.mxu0 0.0
      %1177 = vmatpush.msra.mxu0 0.0
      %1178 = vmatpush.msra.mxu0 0.0
      %1179 = vmatpush.msra.mxu0 0.0
      %1180 = vmatpush.msra.mxu0 0.0
      %1181 = vmatpush.msra.mxu0 0.0
      %1182 = vmatpush.msra.mxu0 %v1161
      %1183 = vmatmul.f32.gmra.mxu0 %v1159
      %v1184 = vpop.f32.mrf.mxu0
      %v1185 = vadd.f32 0.0, %v1184
      %1186 = vdwg.mxu0
      %1187 = vmatpush.msra.mxu0 0.0
      %1188 = vmatpush.msra.mxu0 0.0
      %1189 = vmatpush.msra.mxu0 0.0
      %1190 = vmatpush.msra.mxu0 0.0
      %1191 = vmatpush.msra.mxu0 0.0
      %1192 = vmatpush.msra.mxu0 0.0
      %1193 = vmatpush.msra.mxu0 0.0
      %1194 = vmatpush.msra.mxu0 0.0
      %1195 = vmatpush.msra.mxu0 0.0
      %1196 = vmatpush.msra.mxu0 0.0
      %1197 = vmatpush.msra.mxu0 0.0
      %1198 = vmatpush.msra.mxu0 0.0
      %1199 = vmatpush.msra.mxu0 0.0
      %1200 = vmatpush.msra.mxu0 0.0
      %1201 = vmatpush.msra.mxu0 0.0
      %1202 = vmatpush.msra.mxu0 %v1163
      %1203 = vmatmul.f32.gmra.mxu0 %v1159
      %v1204 = vpop.f32.mrf.mxu0
      %v1205 = vadd.f32 0.0, %v1204
      %1206 = vdwg.mxu0
      %1207 = vmatpush.msra.mxu0 0.0
      %1208 = vmatpush.msra.mxu0 0.0
      %1209 = vmatpush.msra.mxu0 0.0
      %1210 = vmatpush.msra.mxu0 0.0
      %1211 = vmatpush.msra.mxu0 0.0
      %1212 = vmatpush.msra.mxu0 0.0
      %1213 = vmatpush.msra.mxu0 0.0
      %1214 = vmatpush.msra.mxu0 0.0
      %1215 = vmatpush.msra.mxu0 0.0
      %1216 = vmatpush.msra.mxu0 0.0
      %1217 = vmatpush.msra.mxu0 0.0
      %1218 = vmatpush.msra.mxu0 0.0
      %1219 = vmatpush.msra.mxu0 0.0
      %1220 = vmatpush.msra.mxu0 0.0
      %1221 = vmatpush.msra.mxu0 0.0
      %1222 = vmatpush.msra.mxu0 %v1165
      %1223 = vmatmul.f32.gmra.mxu0 %v1159
      %v1224 = vpop.f32.mrf.mxu0
      %v1225 = vadd.f32 0.0, %v1224
      %1226 = vdwg.mxu0
      %v1227 = vadd.f32 %v1153, %v1185
      %v1228 = vadd.f32 %v1154, %v1205
      %v1229 = vadd.f32 %v1155, %v1225
      %1230 = vrot.lane.b32.xlu0 %v523, 127
      %v1231 = vpop.permute.xlu0 %1230
      %1232 = vrot.lane.b32.xlu0 %v516, 127
      %v1233 = vpop.permute.xlu0 %1232
      %1234 = vrot.lane.b32.xlu0 %v524, 127
      %v1235 = vpop.permute.xlu0 %1234
      %vm1236 = vcmask 1039360
      %v1237 = vsel %vm1236, %v1231, %v1233
      %v1238 = vsel %vm1236, %v1233, %v1235
      %vm1242 = vcmask 515072
      %v1243 = vsel %vm1242, %v1235, 0.0
      %v1244 = vmul.f32 %v1237, %v981
      %v1245 = vmul.f32 %v1238, %v981
      %v1246 = vmul.f32 %v1243, %v982
      %s1247 = scalar_lea.vmem %s3, 20
      %v1248 = vld [vmem:[%s1247] sm:$0xf]
      %v1250 = vsel %vm824, %v1248, 0
      %v1253 = vsel %vm828, %v1244, 0
      %v1256 = vsel %vm828, %v1245, 0
      %v1259 = vsel %vm828, %v1246, 0
      %1261 = vmatpush.msra.mxu0 0.0
      %1262 = vmatpush.msra.mxu0 0.0
      %1263 = vmatpush.msra.mxu0 0.0
      %1264 = vmatpush.msra.mxu0 0.0
      %1265 = vmatpush.msra.mxu0 0.0
      %1266 = vmatpush.msra.mxu0 0.0
      %1267 = vmatpush.msra.mxu0 0.0
      %1268 = vmatpush.msra.mxu0 0.0
      %1269 = vmatpush.msra.mxu0 0.0
      %1270 = vmatpush.msra.mxu0 0.0
      %1271 = vmatpush.msra.mxu0 0.0
      %1272 = vmatpush.msra.mxu0 0.0
      %1273 = vmatpush.msra.mxu0 0.0
      %1274 = vmatpush.msra.mxu0 0.0
      %1275 = vmatpush.msra.mxu0 0.0
      %1276 = vmatpush.msra.mxu0 %v1253
      %1277 = vmatmul.f32.gmra.mxu0 %v1250
      %v1278 = vpop.f32.mrf.mxu0
      %v1279 = vadd.f32 0.0, %v1278
      %1280 = vdwg.mxu0
      %1281 = vmatpush.msra.mxu0 0.0
      %1282 = vmatpush.msra.mxu0 0.0
      %1283 = vmatpush.msra.mxu0 0.0
      %1284 = vmatpush.msra.mxu0 0.0
      %1285 = vmatpush.msra.mxu0 0.0
      %1286 = vmatpush.msra.mxu0 0.0
      %1287 = vmatpush.msra.mxu0 0.0
      %1288 = vmatpush.msra.mxu0 0.0
      %1289 = vmatpush.msra.mxu0 0.0
      %1290 = vmatpush.msra.mxu0 0.0
      %1291 = vmatpush.msra.mxu0 0.0
      %1292 = vmatpush.msra.mxu0 0.0
      %1293 = vmatpush.msra.mxu0 0.0
      %1294 = vmatpush.msra.mxu0 0.0
      %1295 = vmatpush.msra.mxu0 0.0
      %1296 = vmatpush.msra.mxu0 %v1256
      %1297 = vmatmul.f32.gmra.mxu0 %v1250
      %v1298 = vpop.f32.mrf.mxu0
      %v1299 = vadd.f32 0.0, %v1298
      %1300 = vdwg.mxu0
      %1301 = vmatpush.msra.mxu0 0.0
      %1302 = vmatpush.msra.mxu0 0.0
      %1303 = vmatpush.msra.mxu0 0.0
      %1304 = vmatpush.msra.mxu0 0.0
      %1305 = vmatpush.msra.mxu0 0.0
      %1306 = vmatpush.msra.mxu0 0.0
      %1307 = vmatpush.msra.mxu0 0.0
      %1308 = vmatpush.msra.mxu0 0.0
      %1309 = vmatpush.msra.mxu0 0.0
      %1310 = vmatpush.msra.mxu0 0.0
      %1311 = vmatpush.msra.mxu0 0.0
      %1312 = vmatpush.msra.mxu0 0.0
      %1313 = vmatpush.msra.mxu0 0.0
      %1314 = vmatpush.msra.mxu0 0.0
      %1315 = vmatpush.msra.mxu0 0.0
      %1316 = vmatpush.msra.mxu0 %v1259
      %1317 = vmatmul.f32.gmra.mxu0 %v1250
      %v1318 = vpop.f32.mrf.mxu0
      %v1319 = vadd.f32 0.0, %v1318
      %1320 = vdwg.mxu0
      %v1321 = vadd.f32 %v1227, %v1279
      %v1322 = vadd.f32 %v1228, %v1299
      %v1323 = vadd.f32 %v1229, %v1319
      %1324 = vrot.lane.b32.xlu0 %v523, 113
      %v1325 = vpop.permute.xlu0 %1324
      %1326 = vrot.lane.b32.xlu0 %v516, 113
      %v1327 = vpop.permute.xlu0 %1326
      %1328 = vrot.lane.b32.xlu0 %v524, 113
      %v1329 = vpop.permute.xlu0 %1328
      %vm1330 = vcmask 924672
      %v1331 = vsel %vm1330, %v1325, %v1327
      %v1332 = vsel %vm1330, %v1327, %v1329
      %vm1336 = vcmask 400384
      %v1337 = vsel %vm1336, %v1329, 0.0
      %v1338 = vmul.f32 %v1331, %v806
      %v1339 = vmul.f32 %v1332, %v806
      %v1340 = vmul.f32 %v1337, %v807
      %s1341 = scalar_lea.vmem %s3, 24
      %v1342 = vld [vmem:[%s1341] sm:$0xf]
      %v1344 = vsel %vm824, %v1342, 0
      %v1347 = vsel %vm828, %v1338, 0
      %v1350 = vsel %vm828, %v1339, 0
      %v1353 = vsel %vm828, %v1340, 0
      %1355 = vmatpush.msra.mxu0 0.0
      %1356 = vmatpush.msra.mxu0 0.0
      %1357 = vmatpush.msra.mxu0 0.0
      %1358 = vmatpush.msra.mxu0 0.0
      %1359 = vmatpush.msra.mxu0 0.0
      %1360 = vmatpush.msra.mxu0 0.0
      %1361 = vmatpush.msra.mxu0 0.0
      %1362 = vmatpush.msra.mxu0 0.0
      %1363 = vmatpush.msra.mxu0 0.0
      %1364 = vmatpush.msra.mxu0 0.0
      %1365 = vmatpush.msra.mxu0 0.0
      %1366 = vmatpush.msra.mxu0 0.0
      %1367 = vmatpush.msra.mxu0 0.0
      %1368 = vmatpush.msra.mxu0 0.0
      %1369 = vmatpush.msra.mxu0 0.0
      %1370 = vmatpush.msra.mxu0 %v1347
      %1371 = vmatmul.f32.gmra.mxu0 %v1344
      %v1372 = vpop.f32.mrf.mxu0
      %v1373 = vadd.f32 0.0, %v1372
      %1374 = vdwg.mxu0
      %1375 = vmatpush.msra.mxu0 0.0
      %1376 = vmatpush.msra.mxu0 0.0
      %1377 = vmatpush.msra.mxu0 0.0
      %1378 = vmatpush.msra.mxu0 0.0
      %1379 = vmatpush.msra.mxu0 0.0
      %1380 = vmatpush.msra.mxu0 0.0
      %1381 = vmatpush.msra.mxu0 0.0
      %1382 = vmatpush.msra.mxu0 0.0
      %1383 = vmatpush.msra.mxu0 0.0
      %1384 = vmatpush.msra.mxu0 0.0
      %1385 = vmatpush.msra.mxu0 0.0
      %1386 = vmatpush.msra.mxu0 0.0
      %1387 = vmatpush.msra.mxu0 0.0
      %1388 = vmatpush.msra.mxu0 0.0
      %1389 = vmatpush.msra.mxu0 0.0
      %1390 = vmatpush.msra.mxu0 %v1350
      %1391 = vmatmul.f32.gmra.mxu0 %v1344
      %v1392 = vpop.f32.mrf.mxu0
      %v1393 = vadd.f32 0.0, %v1392
      %1394 = vdwg.mxu0
      %1395 = vmatpush.msra.mxu0 0.0
      %1396 = vmatpush.msra.mxu0 0.0
      %1397 = vmatpush.msra.mxu0 0.0
      %1398 = vmatpush.msra.mxu0 0.0
      %1399 = vmatpush.msra.mxu0 0.0
      %1400 = vmatpush.msra.mxu0 0.0
      %1401 = vmatpush.msra.mxu0 0.0
      %1402 = vmatpush.msra.mxu0 0.0
      %1403 = vmatpush.msra.mxu0 0.0
      %1404 = vmatpush.msra.mxu0 0.0
      %1405 = vmatpush.msra.mxu0 0.0
      %1406 = vmatpush.msra.mxu0 0.0
      %1407 = vmatpush.msra.mxu0 0.0
      %1408 = vmatpush.msra.mxu0 0.0
      %1409 = vmatpush.msra.mxu0 0.0
      %1410 = vmatpush.msra.mxu0 %v1353
      %1411 = vmatmul.f32.gmra.mxu0 %v1344
      %v1412 = vpop.f32.mrf.mxu0
      %v1413 = vadd.f32 0.0, %v1412
      %1414 = vdwg.mxu0
      %v1415 = vadd.f32 %v1321, %v1373
      %v1416 = vadd.f32 %v1322, %v1393
      %v1417 = vadd.f32 %v1323, %v1413
      %1418 = vrot.lane.b32.xlu0 %v523, 112
      %v1419 = vpop.permute.xlu0 %1418
      %1420 = vrot.lane.b32.xlu0 %v516, 112
      %v1421 = vpop.permute.xlu0 %1420
      %1422 = vrot.lane.b32.xlu0 %v524, 112
      %v1423 = vpop.permute.xlu0 %1422
      %v1424 = vsel %vm591, %v1419, %v1421
      %v1425 = vsel %vm591, %v1421, %v1423
      %v1427 = vsel %vm583, %v1423, 0.0
      %s1428 = scalar_lea.vmem %s3, 28
      %v1429 = vld [vmem:[%s1428] sm:$0xf]
      %v1431 = vsel %vm824, %v1429, 0
      %v1433 = vsel %vm828, %v1424, 0
      %v1435 = vsel %vm828, %v1425, 0
      %v1438 = vsel %vm828, %v1427, 0
      %1440 = vmatpush.msra.mxu0 0.0
      %1441 = vmatpush.msra.mxu0 0.0
      %1442 = vmatpush.msra.mxu0 0.0
      %1443 = vmatpush.msra.mxu0 0.0
      %1444 = vmatpush.msra.mxu0 0.0
      %1445 = vmatpush.msra.mxu0 0.0
      %1446 = vmatpush.msra.mxu0 0.0
      %1447 = vmatpush.msra.mxu0 0.0
      %1448 = vmatpush.msra.mxu0 0.0
      %1449 = vmatpush.msra.mxu0 0.0
      %1450 = vmatpush.msra.mxu0 0.0
      %1451 = vmatpush.msra.mxu0 0.0
      %1452 = vmatpush.msra.mxu0 0.0
      %1453 = vmatpush.msra.mxu0 0.0
      %1454 = vmatpush.msra.mxu0 0.0
      %1455 = vmatpush.msra.mxu0 %v1433
      %1456 = vmatmul.f32.gmra.mxu0 %v1431
      %v1457 = vpop.f32.mrf.mxu0
      %v1458 = vadd.f32 0.0, %v1457
      %1459 = vdwg.mxu0
      %1460 = vmatpush.msra.mxu0 0.0
      %1461 = vmatpush.msra.mxu0 0.0
      %1462 = vmatpush.msra.mxu0 0.0
      %1463 = vmatpush.msra.mxu0 0.0
      %1464 = vmatpush.msra.mxu0 0.0
      %1465 = vmatpush.msra.mxu0 0.0
      %1466 = vmatpush.msra.mxu0 0.0
      %1467 = vmatpush.msra.mxu0 0.0
      %1468 = vmatpush.msra.mxu0 0.0
      %1469 = vmatpush.msra.mxu0 0.0
      %1470 = vmatpush.msra.mxu0 0.0
      %1471 = vmatpush.msra.mxu0 0.0
      %1472 = vmatpush.msra.mxu0 0.0
      %1473 = vmatpush.msra.mxu0 0.0
      %1474 = vmatpush.msra.mxu0 0.0
      %1475 = vmatpush.msra.mxu0 %v1435
      %1476 = vmatmul.f32.gmra.mxu0 %v1431
      %v1477 = vpop.f32.mrf.mxu0
      %v1478 = vadd.f32 0.0, %v1477
      %1479 = vdwg.mxu0
      %1480 = vmatpush.msra.mxu0 0.0
      %1481 = vmatpush.msra.mxu0 0.0
      %1482 = vmatpush.msra.mxu0 0.0
      %1483 = vmatpush.msra.mxu0 0.0
      %1484 = vmatpush.msra.mxu0 0.0
      %1485 = vmatpush.msra.mxu0 0.0
      %1486 = vmatpush.msra.mxu0 0.0
      %1487 = vmatpush.msra.mxu0 0.0
      %1488 = vmatpush.msra.mxu0 0.0
      %1489 = vmatpush.msra.mxu0 0.0
      %1490 = vmatpush.msra.mxu0 0.0
      %1491 = vmatpush.msra.mxu0 0.0
      %1492 = vmatpush.msra.mxu0 0.0
      %1493 = vmatpush.msra.mxu0 0.0
      %1494 = vmatpush.msra.mxu0 0.0
      %1495 = vmatpush.msra.mxu0 %v1438
      %1496 = vmatmul.f32.gmra.mxu0 %v1431
      %v1497 = vpop.f32.mrf.mxu0
      %v1498 = vadd.f32 0.0, %v1497
      %1499 = vdwg.mxu0
      %v1500 = vadd.f32 %v1415, %v1458
      %v1501 = vadd.f32 %v1416, %v1478
      %v1502 = vadd.f32 %v1417, %v1498
      %1503 = vrot.lane.b32.xlu0 %v523, 111
      %v1504 = vpop.permute.xlu0 %1503
      %1505 = vrot.lane.b32.xlu0 %v516, 111
      %v1506 = vpop.permute.xlu0 %1505
      %1507 = vrot.lane.b32.xlu0 %v524, 111
      %v1508 = vpop.permute.xlu0 %1507
      %vm1509 = vcmask 908288
      %v1510 = vsel %vm1509, %v1504, %v1506
      %v1511 = vsel %vm1509, %v1506, %v1508
      %vm1515 = vcmask 384000
      %v1516 = vsel %vm1515, %v1508, 0.0
      %v1517 = vmul.f32 %v1510, %v981
      %v1518 = vmul.f32 %v1511, %v981
      %v1519 = vmul.f32 %v1516, %v982
      %s1520 = scalar_lea.vmem %s3, 32
      %v1521 = vld [vmem:[%s1520] sm:$0xf]
      %v1523 = vsel %vm824, %v1521, 0
      %v1526 = vsel %vm828, %v1517, 0
      %v1529 = vsel %vm828, %v1518, 0
      %v1532 = vsel %vm828, %v1519, 0
      %1534 = vmatpush.msra.mxu0 0.0
      %1535 = vmatpush.msra.mxu0 0.0
      %1536 = vmatpush.msra.mxu0 0.0
      %1537 = vmatpush.msra.mxu0 0.0
      %1538 = vmatpush.msra.mxu0 0.0
      %1539 = vmatpush.msra.mxu0 0.0
      %1540 = vmatpush.msra.mxu0 0.0
      %1541 = vmatpush.msra.mxu0 0.0
      %1542 = vmatpush.msra.mxu0 0.0
      %1543 = vmatpush.msra.mxu0 0.0
      %1544 = vmatpush.msra.mxu0 0.0
      %1545 = vmatpush.msra.mxu0 0.0
      %1546 = vmatpush.msra.mxu0 0.0
      %1547 = vmatpush.msra.mxu0 0.0
      %1548 = vmatpush.msra.mxu0 0.0
      %1549 = vmatpush.msra.mxu0 %v1526
      %1550 = vmatmul.f32.gmra.mxu0 %v1523
      %v1551 = vpop.f32.mrf.mxu0
      %v1552 = vadd.f32 0.0, %v1551
      %1553 = vdwg.mxu0
      %1554 = vmatpush.msra.mxu0 0.0
      %1555 = vmatpush.msra.mxu0 0.0
      %1556 = vmatpush.msra.mxu0 0.0
      %1557 = vmatpush.msra.mxu0 0.0
      %1558 = vmatpush.msra.mxu0 0.0
      %1559 = vmatpush.msra.mxu0 0.0
      %1560 = vmatpush.msra.mxu0 0.0
      %1561 = vmatpush.msra.mxu0 0.0
      %1562 = vmatpush.msra.mxu0 0.0
      %1563 = vmatpush.msra.mxu0 0.0
      %1564 = vmatpush.msra.mxu0 0.0
      %1565 = vmatpush.msra.mxu0 0.0
      %1566 = vmatpush.msra.mxu0 0.0
      %1567 = vmatpush.msra.mxu0 0.0
      %1568 = vmatpush.msra.mxu0 0.0
      %1569 = vmatpush.msra.mxu0 %v1529
      %1570 = vmatmul.f32.gmra.mxu0 %v1523
      %v1571 = vpop.f32.mrf.mxu0
      %v1572 = vadd.f32 0.0, %v1571
      %1573 = vdwg.mxu0
      %1574 = vmatpush.msra.mxu0 0.0
      %1575 = vmatpush.msra.mxu0 0.0
      %1576 = vmatpush.msra.mxu0 0.0
      %1577 = vmatpush.msra.mxu0 0.0
      %1578 = vmatpush.msra.mxu0 0.0
      %1579 = vmatpush.msra.mxu0 0.0
      %1580 = vmatpush.msra.mxu0 0.0
      %1581 = vmatpush.msra.mxu0 0.0
      %1582 = vmatpush.msra.mxu0 0.0
      %1583 = vmatpush.msra.mxu0 0.0
      %1584 = vmatpush.msra.mxu0 0.0
      %1585 = vmatpush.msra.mxu0 0.0
      %1586 = vmatpush.msra.mxu0 0.0
      %1587 = vmatpush.msra.mxu0 0.0
      %1588 = vmatpush.msra.mxu0 0.0
      %1589 = vmatpush.msra.mxu0 %v1532
      %1590 = vmatmul.f32.gmra.mxu0 %v1523
      %v1591 = vpop.f32.mrf.mxu0
      %v1592 = vadd.f32 0.0, %v1591
      %1593 = vdwg.mxu0
      %v1594 = vadd.f32 %v1500, %v1552
      %v1595 = vadd.f32 %v1501, %v1572
      %v1596 = vadd.f32 %v1502, %v1592
      %v1597 = vld [vmem:[%s5] sm:$0xf]
      %1599 = vset.pattern.permute.xlu0 0
      %1600 = vperm.xlu0 %1599, %v1597
      %v1601 = vpop.permute.xlu0 %1600
      %v1603 = vmul.f32 %v1594, %v1601
      %v1604 = vmul.f32 %v1595, %v1601
      %v1605 = vmul.f32 %v1596, %v1601
      %v1606 = vld [vmem:[%s6] sm:$0xf]
      %1608 = vset.pattern.permute.xlu0 0
      %1609 = vperm.xlu0 %1608, %v1606
      %v1610 = vpop.permute.xlu0 %1609
      %v1612 = vadd.f32 %v1603, %v1610
      %v1613 = vadd.f32 %v1604, %v1610
      %v1614 = vadd.f32 %v1605, %v1610
      %v1615 = vmax.f32 %v1612, 0.0
      %v1616 = vmax.f32 %v1613, 0.0
      %v1617 = vmax.f32 %v1614, 0.0
      %v1618 = vperm.slane %v788, 0
      %v1619 = vperm.slane %v789, 0
      %v1620 = vperm.slane %v790, 0
      %v1621 = vmul.f32 %v1615, %v1618
      %v1622 = vmul.f32 %v1616, %v1619
      %v1623 = vmul.f32 %v1617, %v1620
      %1627 = vrot.lane.b32.xlu0 %v1621, 17
      %v1628 = vpop.permute.xlu0 %1627
      %1629 = vrot.lane.b32.xlu0 %v1622, 17
      %v1630 = vpop.permute.xlu0 %1629
      %1631 = vrot.lane.b32.xlu0 %v1623, 17
      %v1632 = vpop.permute.xlu0 %1631
      %v1633 = vsel %vm799, %v1628, %v1630
      %v1634 = vsel %vm799, %v1630, %v1632
      %v1638 = vsel %vm799, 0.0, %v1628
      %v1639 = vmul.f32 %v1638, %v806
      %v1640 = vmul.f32 %v1633, %v806
      %v1641 = vmul.f32 %v1634, %v807
      %v1642 = vld [vmem:[%s4] sm:$0xf]
      %1643 = vrot.lane.b32.xlu0 %v1621, 16
      %v1644 = vpop.permute.xlu0 %1643
      %1645 = vrot.lane.b32.xlu0 %v1622, 16
      %v1646 = vpop.permute.xlu0 %1645
      %1647 = vrot.lane.b32.xlu0 %v1623, 16
      %v1648 = vpop.permute.xlu0 %1647
      %v1649 = vsel %vm580, %v1644, %v1646
      %v1650 = vsel %vm580, %v1646, %v1648
      %v1652 = vsel %vm580, 0.0, %v1644
      %s1653 = scalar_lea.vmem %s4, 4
      %v1654 = vld [vmem:[%s1653] sm:$0xf]
      %v1656 = vsel %vm824, %v1654, 0
      %v1659 = vsel %vm828, %v1652, 0
      %v1661 = vsel %vm828, %v1649, 0
      %v1663 = vsel %vm828, %v1650, 0
      %1665 = vmatpush.msra.mxu0 0.0
      %1666 = vmatpush.msra.mxu0 0.0
      %1667 = vmatpush.msra.mxu0 0.0
      %1668 = vmatpush.msra.mxu0 0.0
      %1669 = vmatpush.msra.mxu0 0.0
      %1670 = vmatpush.msra.mxu0 0.0
      %1671 = vmatpush.msra.mxu0 0.0
      %1672 = vmatpush.msra.mxu0 0.0
      %1673 = vmatpush.msra.mxu0 0.0
      %1674 = vmatpush.msra.mxu0 0.0
      %1675 = vmatpush.msra.mxu0 0.0
      %1676 = vmatpush.msra.mxu0 0.0
      %1677 = vmatpush.msra.mxu0 0.0
      %1678 = vmatpush.msra.mxu0 0.0
      %1679 = vmatpush.msra.mxu0 0.0
      %1680 = vmatpush.msra.mxu0 %v1659
      %1681 = vmatmul.f32.gmra.mxu0 %v1656
      %v1682 = vpop.f32.mrf.mxu0
      %v1683 = vadd.f32 0.0, %v1682
      %1684 = vdwg.mxu0
      %1685 = vmatpush.msra.mxu0 0.0
      %1686 = vmatpush.msra.mxu0 0.0
      %1687 = vmatpush.msra.mxu0 0.0
      %1688 = vmatpush.msra.mxu0 0.0
      %1689 = vmatpush.msra.mxu0 0.0
      %1690 = vmatpush.msra.mxu0 0.0
      %1691 = vmatpush.msra.mxu0 0.0
      %1692 = vmatpush.msra.mxu0 0.0
      %1693 = vmatpush.msra.mxu0 0.0
      %1694 = vmatpush.msra.mxu0 0.0
      %1695 = vmatpush.msra.mxu0 0.0
      %1696 = vmatpush.msra.mxu0 0.0
      %1697 = vmatpush.msra.mxu0 0.0
      %1698 = vmatpush.msra.mxu0 0.0
      %1699 = vmatpush.msra.mxu0 0.0
      %1700 = vmatpush.msra.mxu0 %v1661
      %1701 = vmatmul.f32.gmra.mxu0 %v1656
      %v1702 = vpop.f32.mrf.mxu0
      %v1703 = vadd.f32 0.0, %v1702
      %1704 = vdwg.mxu0
      %1705 = vmatpush.msra.mxu0 0.0
      %1706 = vmatpush.msra.mxu0 0.0
      %1707 = vmatpush.msra.mxu0 0.0
      %1708 = vmatpush.msra.mxu0 0.0
      %1709 = vmatpush.msra.mxu0 0.0
      %1710 = vmatpush.msra.mxu0 0.0
      %1711 = vmatpush.msra.mxu0 0.0
      %1712 = vmatpush.msra.mxu0 0.0
      %1713 = vmatpush.msra.mxu0 0.0
      %1714 = vmatpush.msra.mxu0 0.0
      %1715 = vmatpush.msra.mxu0 0.0
      %1716 = vmatpush.msra.mxu0 0.0
      %1717 = vmatpush.msra.mxu0 0.0
      %1718 = vmatpush.msra.mxu0 0.0
      %1719 = vmatpush.msra.mxu0 0.0
      %1720 = vmatpush.msra.mxu0 %v1663
      %1721 = vmatmul.f32.gmra.mxu0 %v1656
      %v1722 = vpop.f32.mrf.mxu0
      %v1723 = vadd.f32 0.0, %v1722
      %1724 = vdwg.mxu0
      %v1726 = vsel %vm824, %v1642, 0
      %v1729 = vsel %vm828, %v1639, 0
      %v1732 = vsel %vm828, %v1640, 0
      %v1735 = vsel %vm828, %v1641, 0
      %1737 = vmatpush.msra.mxu0 0.0
      %1738 = vmatpush.msra.mxu0 0.0
      %1739 = vmatpush.msra.mxu0 0.0
      %1740 = vmatpush.msra.mxu0 0.0
      %1741 = vmatpush.msra.mxu0 0.0
      %1742 = vmatpush.msra.mxu0 0.0
      %1743 = vmatpush.msra.mxu0 0.0
      %1744 = vmatpush.msra.mxu0 0.0
      %1745 = vmatpush.msra.mxu0 0.0
      %1746 = vmatpush.msra.mxu0 0.0
      %1747 = vmatpush.msra.mxu0 0.0
      %1748 = vmatpush.msra.mxu0 0.0
      %1749 = vmatpush.msra.mxu0 0.0
      %1750 = vmatpush.msra.mxu0 0.0
      %1751 = vmatpush.msra.mxu0 0.0
      %1752 = vmatpush.msra.mxu0 %v1729
      %1753 = vmatmul.f32.gmra.mxu0 %v1726
      %v1754 = vpop.f32.mrf.mxu0
      %v1755 = vadd.f32 %v1683, %v1754
      %1756 = vdwg.mxu0
      %1757 = vmatpush.msra.mxu0 0.0
      %1758 = vmatpush.msra.mxu0 0.0
      %1759 = vmatpush.msra.mxu0 0.0
      %1760 = vmatpush.msra.mxu0 0.0
      %1761 = vmatpush.msra.mxu0 0.0
      %1762 = vmatpush.msra.mxu0 0.0
      %1763 = vmatpush.msra.mxu0 0.0
      %1764 = vmatpush.msra.mxu0 0.0
      %1765 = vmatpush.msra.mxu0 0.0
      %1766 = vmatpush.msra.mxu0 0.0
      %1767 = vmatpush.msra.mxu0 0.0
      %1768 = vmatpush.msra.mxu0 0.0
      %1769 = vmatpush.msra.mxu0 0.0
      %1770 = vmatpush.msra.mxu0 0.0
      %1771 = vmatpush.msra.mxu0 0.0
      %1772 = vmatpush.msra.mxu0 %v1732
      %1773 = vmatmul.f32.gmra.mxu0 %v1726
      %v1774 = vpop.f32.mrf.mxu0
      %v1775 = vadd.f32 %v1703, %v1774
      %1776 = vdwg.mxu0
      %1777 = vmatpush.msra.mxu0 0.0
      %1778 = vmatpush.msra.mxu0 0.0
      %1779 = vmatpush.msra.mxu0 0.0
      %1780 = vmatpush.msra.mxu0 0.0
      %1781 = vmatpush.msra.mxu0 0.0
      %1782 = vmatpush.msra.mxu0 0.0
      %1783 = vmatpush.msra.mxu0 0.0
      %1784 = vmatpush.msra.mxu0 0.0
      %1785 = vmatpush.msra.mxu0 0.0
      %1786 = vmatpush.msra.mxu0 0.0
      %1787 = vmatpush.msra.mxu0 0.0
      %1788 = vmatpush.msra.mxu0 0.0
      %1789 = vmatpush.msra.mxu0 0.0
      %1790 = vmatpush.msra.mxu0 0.0
      %1791 = vmatpush.msra.mxu0 0.0
      %1792 = vmatpush.msra.mxu0 %v1735
      %1793 = vmatmul.f32.gmra.mxu0 %v1726
      %v1794 = vpop.f32.mrf.mxu0
      %v1795 = vadd.f32 %v1723, %v1794
      %1796 = vdwg.mxu0
      %1797 = vrot.lane.b32.xlu0 %v1621, 15
      %v1798 = vpop.permute.xlu0 %1797
      %1799 = vrot.lane.b32.xlu0 %v1622, 15
      %v1800 = vpop.permute.xlu0 %1799
      %1801 = vrot.lane.b32.xlu0 %v1623, 15
      %v1802 = vpop.permute.xlu0 %1801
      %v1803 = vsel %vm974, %v1798, %v1800
      %v1804 = vsel %vm974, %v1800, %v1802
      %v1808 = vsel %vm974, 0.0, %v1798
      %v1809 = vmul.f32 %v1808, %v981
      %v1810 = vmul.f32 %v1803, %v981
      %v1811 = vmul.f32 %v1804, %v982
      %s1812 = scalar_lea.vmem %s4, 8
      %v1813 = vld [vmem:[%s1812] sm:$0xf]
      %v1815 = vsel %vm824, %v1813, 0
      %v1818 = vsel %vm828, %v1809, 0
      %v1821 = vsel %vm828, %v1810, 0
      %v1824 = vsel %vm828, %v1811, 0
      %1826 = vmatpush.msra.mxu0 0.0
      %1827 = vmatpush.msra.mxu0 0.0
      %1828 = vmatpush.msra.mxu0 0.0
      %1829 = vmatpush.msra.mxu0 0.0
      %1830 = vmatpush.msra.mxu0 0.0
      %1831 = vmatpush.msra.mxu0 0.0
      %1832 = vmatpush.msra.mxu0 0.0
      %1833 = vmatpush.msra.mxu0 0.0
      %1834 = vmatpush.msra.mxu0 0.0
      %1835 = vmatpush.msra.mxu0 0.0
      %1836 = vmatpush.msra.mxu0 0.0
      %1837 = vmatpush.msra.mxu0 0.0
      %1838 = vmatpush.msra.mxu0 0.0
      %1839 = vmatpush.msra.mxu0 0.0
      %1840 = vmatpush.msra.mxu0 0.0
      %1841 = vmatpush.msra.mxu0 %v1818
      %1842 = vmatmul.f32.gmra.mxu0 %v1815
      %v1843 = vpop.f32.mrf.mxu0
      %v1844 = vadd.f32 0.0, %v1843
      %1845 = vdwg.mxu0
      %1846 = vmatpush.msra.mxu0 0.0
      %1847 = vmatpush.msra.mxu0 0.0
      %1848 = vmatpush.msra.mxu0 0.0
      %1849 = vmatpush.msra.mxu0 0.0
      %1850 = vmatpush.msra.mxu0 0.0
      %1851 = vmatpush.msra.mxu0 0.0
      %1852 = vmatpush.msra.mxu0 0.0
      %1853 = vmatpush.msra.mxu0 0.0
      %1854 = vmatpush.msra.mxu0 0.0
      %1855 = vmatpush.msra.mxu0 0.0
      %1856 = vmatpush.msra.mxu0 0.0
      %1857 = vmatpush.msra.mxu0 0.0
      %1858 = vmatpush.msra.mxu0 0.0
      %1859 = vmatpush.msra.mxu0 0.0
      %1860 = vmatpush.msra.mxu0 0.0
      %1861 = vmatpush.msra.mxu0 %v1821
      %1862 = vmatmul.f32.gmra.mxu0 %v1815
      %v1863 = vpop.f32.mrf.mxu0
      %v1864 = vadd.f32 0.0, %v1863
      %1865 = vdwg.mxu0
      %1866 = vmatpush.msra.mxu0 0.0
      %1867 = vmatpush.msra.mxu0 0.0
      %1868 = vmatpush.msra.mxu0 0.0
      %1869 = vmatpush.msra.mxu0 0.0
      %1870 = vmatpush.msra.mxu0 0.0
      %1871 = vmatpush.msra.mxu0 0.0
      %1872 = vmatpush.msra.mxu0 0.0
      %1873 = vmatpush.msra.mxu0 0.0
      %1874 = vmatpush.msra.mxu0 0.0
      %1875 = vmatpush.msra.mxu0 0.0
      %1876 = vmatpush.msra.mxu0 0.0
      %1877 = vmatpush.msra.mxu0 0.0
      %1878 = vmatpush.msra.mxu0 0.0
      %1879 = vmatpush.msra.mxu0 0.0
      %1880 = vmatpush.msra.mxu0 0.0
      %1881 = vmatpush.msra.mxu0 %v1824
      %1882 = vmatmul.f32.gmra.mxu0 %v1815
      %v1883 = vpop.f32.mrf.mxu0
      %v1884 = vadd.f32 0.0, %v1883
      %1885 = vdwg.mxu0
      %v1886 = vadd.f32 %v1755, %v1844
      %v1887 = vadd.f32 %v1775, %v1864
      %v1888 = vadd.f32 %v1795, %v1884
      %1889 = vrot.lane.b32.xlu0 %v1621, 1
      %v1890 = vpop.permute.xlu0 %1889
      %1891 = vrot.lane.b32.xlu0 %v1622, 1
      %v1892 = vpop.permute.xlu0 %1891
      %1893 = vrot.lane.b32.xlu0 %v1623, 1
      %v1894 = vpop.permute.xlu0 %1893
      %v1895 = vsel %vm1069, %v1890, %v1892
      %v1896 = vsel %vm1069, %v1892, %v1894
      %v1900 = vsel %vm1069, 0.0, %v1890
      %v1901 = vmul.f32 %v1900, %v806
      %v1902 = vmul.f32 %v1895, %v806
      %v1903 = vmul.f32 %v1896, %v807
      %s1904 = scalar_lea.vmem %s4, 12
      %v1905 = vld [vmem:[%s1904] sm:$0xf]
      %v1907 = vsel %vm824, %v1905, 0
      %v1910 = vsel %vm828, %v1901, 0
      %v1913 = vsel %vm828, %v1902, 0
      %v1916 = vsel %vm828, %v1903, 0
      %1918 = vmatpush.msra.mxu0 0.0
      %1919 = vmatpush.msra.mxu0 0.0
      %1920 = vmatpush.msra.mxu0 0.0
      %1921 = vmatpush.msra.mxu0 0.0
      %1922 = vmatpush.msra.mxu0 0.0
      %1923 = vmatpush.msra.mxu0 0.0
      %1924 = vmatpush.msra.mxu0 0.0
      %1925 = vmatpush.msra.mxu0 0.0
      %1926 = vmatpush.msra.mxu0 0.0
      %1927 = vmatpush.msra.mxu0 0.0
      %1928 = vmatpush.msra.mxu0 0.0
      %1929 = vmatpush.msra.mxu0 0.0
      %1930 = vmatpush.msra.mxu0 0.0
      %1931 = vmatpush.msra.mxu0 0.0
      %1932 = vmatpush.msra.mxu0 0.0
      %1933 = vmatpush.msra.mxu0 %v1910
      %1934 = vmatmul.f32.gmra.mxu0 %v1907
      %v1935 = vpop.f32.mrf.mxu0
      %v1936 = vadd.f32 0.0, %v1935
      %1937 = vdwg.mxu0
      %1938 = vmatpush.msra.mxu0 0.0
      %1939 = vmatpush.msra.mxu0 0.0
      %1940 = vmatpush.msra.mxu0 0.0
      %1941 = vmatpush.msra.mxu0 0.0
      %1942 = vmatpush.msra.mxu0 0.0
      %1943 = vmatpush.msra.mxu0 0.0
      %1944 = vmatpush.msra.mxu0 0.0
      %1945 = vmatpush.msra.mxu0 0.0
      %1946 = vmatpush.msra.mxu0 0.0
      %1947 = vmatpush.msra.mxu0 0.0
      %1948 = vmatpush.msra.mxu0 0.0
      %1949 = vmatpush.msra.mxu0 0.0
      %1950 = vmatpush.msra.mxu0 0.0
      %1951 = vmatpush.msra.mxu0 0.0
      %1952 = vmatpush.msra.mxu0 0.0
      %1953 = vmatpush.msra.mxu0 %v1913
      %1954 = vmatmul.f32.gmra.mxu0 %v1907
      %v1955 = vpop.f32.mrf.mxu0
      %v1956 = vadd.f32 0.0, %v1955
      %1957 = vdwg.mxu0
      %1958 = vmatpush.msra.mxu0 0.0
      %1959 = vmatpush.msra.mxu0 0.0
      %1960 = vmatpush.msra.mxu0 0.0
      %1961 = vmatpush.msra.mxu0 0.0
      %1962 = vmatpush.msra.mxu0 0.0
      %1963 = vmatpush.msra.mxu0 0.0
      %1964 = vmatpush.msra.mxu0 0.0
      %1965 = vmatpush.msra.mxu0 0.0
      %1966 = vmatpush.msra.mxu0 0.0
      %1967 = vmatpush.msra.mxu0 0.0
      %1968 = vmatpush.msra.mxu0 0.0
      %1969 = vmatpush.msra.mxu0 0.0
      %1970 = vmatpush.msra.mxu0 0.0
      %1971 = vmatpush.msra.mxu0 0.0
      %1972 = vmatpush.msra.mxu0 0.0
      %1973 = vmatpush.msra.mxu0 %v1916
      %1974 = vmatmul.f32.gmra.mxu0 %v1907
      %v1975 = vpop.f32.mrf.mxu0
      %v1976 = vadd.f32 0.0, %v1975
      %1977 = vdwg.mxu0
      %v1978 = vadd.f32 %v1886, %v1936
      %v1979 = vadd.f32 %v1887, %v1956
      %v1980 = vadd.f32 %v1888, %v1976
      %s1981 = scalar_lea.vmem %s4, 16
      %v1982 = vld [vmem:[%s1981] sm:$0xf]
      %v1984 = vsel %vm824, %v1982, 0
      %v1986 = vsel %vm828, %v1621, 0
      %v1988 = vsel %vm828, %v1622, 0
      %v1990 = vsel %vm828, %v1623, 0
      %1992 = vmatpush.msra.mxu0 0.0
      %1993 = vmatpush.msra.mxu0 0.0
      %1994 = vmatpush.msra.mxu0 0.0
      %1995 = vmatpush.msra.mxu0 0.0
      %1996 = vmatpush.msra.mxu0 0.0
      %1997 = vmatpush.msra.mxu0 0.0
      %1998 = vmatpush.msra.mxu0 0.0
      %1999 = vmatpush.msra.mxu0 0.0
      %2000 = vmatpush.msra.mxu0 0.0
      %2001 = vmatpush.msra.mxu0 0.0
      %2002 = vmatpush.msra.mxu0 0.0
      %2003 = vmatpush.msra.mxu0 0.0
      %2004 = vmatpush.msra.mxu0 0.0
      %2005 = vmatpush.msra.mxu0 0.0
      %2006 = vmatpush.msra.mxu0 0.0
      %2007 = vmatpush.msra.mxu0 %v1986
      %2008 = vmatmul.f32.gmra.mxu0 %v1984
      %v2009 = vpop.f32.mrf.mxu0
      %v2010 = vadd.f32 0.0, %v2009
      %2011 = vdwg.mxu0
      %2012 = vmatpush.msra.mxu0 0.0
      %2013 = vmatpush.msra.mxu0 0.0
      %2014 = vmatpush.msra.mxu0 0.0
      %2015 = vmatpush.msra.mxu0 0.0
      %2016 = vmatpush.msra.mxu0 0.0
      %2017 = vmatpush.msra.mxu0 0.0
      %2018 = vmatpush.msra.mxu0 0.0
      %2019 = vmatpush.msra.mxu0 0.0
      %2020 = vmatpush.msra.mxu0 0.0
      %2021 = vmatpush.msra.mxu0 0.0
      %2022 = vmatpush.msra.mxu0 0.0
      %2023 = vmatpush.msra.mxu0 0.0
      %2024 = vmatpush.msra.mxu0 0.0
      %2025 = vmatpush.msra.mxu0 0.0
      %2026 = vmatpush.msra.mxu0 0.0
      %2027 = vmatpush.msra.mxu0 %v1988
      %2028 = vmatmul.f32.gmra.mxu0 %v1984
      %v2029 = vpop.f32.mrf.mxu0
      %v2030 = vadd.f32 0.0, %v2029
      %2031 = vdwg.mxu0
      %2032 = vmatpush.msra.mxu0 0.0
      %2033 = vmatpush.msra.mxu0 0.0
      %2034 = vmatpush.msra.mxu0 0.0
      %2035 = vmatpush.msra.mxu0 0.0
      %2036 = vmatpush.msra.mxu0 0.0
      %2037 = vmatpush.msra.mxu0 0.0
      %2038 = vmatpush.msra.mxu0 0.0
      %2039 = vmatpush.msra.mxu0 0.0
      %2040 = vmatpush.msra.mxu0 0.0
      %2041 = vmatpush.msra.mxu0 0.0
      %2042 = vmatpush.msra.mxu0 0.0
      %2043 = vmatpush.msra.mxu0 0.0
      %2044 = vmatpush.msra.mxu0 0.0
      %2045 = vmatpush.msra.mxu0 0.0
      %2046 = vmatpush.msra.mxu0 0.0
      %2047 = vmatpush.msra.mxu0 %v1990
      %2048 = vmatmul.f32.gmra.mxu0 %v1984
      %v2049 = vpop.f32.mrf.mxu0
      %v2050 = vadd.f32 0.0, %v2049
      %2051 = vdwg.mxu0
      %v2052 = vadd.f32 %v1978, %v2010
      %v2053 = vadd.f32 %v1979, %v2030
      %v2054 = vadd.f32 %v1980, %v2050
      %2055 = vrot.lane.b32.xlu0 %v1621, 127
      %v2056 = vpop.permute.xlu0 %2055
      %2057 = vrot.lane.b32.xlu0 %v1622, 127
      %v2058 = vpop.permute.xlu0 %2057
      %2059 = vrot.lane.b32.xlu0 %v1623, 127
      %v2060 = vpop.permute.xlu0 %2059
      %v2061 = vsel %vm1236, %v2056, %v2058
      %v2062 = vsel %vm1236, %v2058, %v2060
      %v2066 = vsel %vm1242, %v2060, 0.0
      %v2067 = vmul.f32 %v2061, %v981
      %v2068 = vmul.f32 %v2062, %v981
      %v2069 = vmul.f32 %v2066, %v982
      %s2070 = scalar_lea.vmem %s4, 20
      %v2071 = vld [vmem:[%s2070] sm:$0xf]
      %v2073 = vsel %vm824, %v2071, 0
      %v2076 = vsel %vm828, %v2067, 0
      %v2079 = vsel %vm828, %v2068, 0
      %v2082 = vsel %vm828, %v2069, 0
      %2084 = vmatpush.msra.mxu0 0.0
      %2085 = vmatpush.msra.mxu0 0.0
      %2086 = vmatpush.msra.mxu0 0.0
      %2087 = vmatpush.msra.mxu0 0.0
      %2088 = vmatpush.msra.mxu0 0.0
      %2089 = vmatpush.msra.mxu0 0.0
      %2090 = vmatpush.msra.mxu0 0.0
      %2091 = vmatpush.msra.mxu0 0.0
      %2092 = vmatpush.msra.mxu0 0.0
      %2093 = vmatpush.msra.mxu0 0.0
      %2094 = vmatpush.msra.mxu0 0.0
      %2095 = vmatpush.msra.mxu0 0.0
      %2096 = vmatpush.msra.mxu0 0.0
      %2097 = vmatpush.msra.mxu0 0.0
      %2098 = vmatpush.msra.mxu0 0.0
      %2099 = vmatpush.msra.mxu0 %v2076
      %2100 = vmatmul.f32.gmra.mxu0 %v2073
      %v2101 = vpop.f32.mrf.mxu0
      %v2102 = vadd.f32 0.0, %v2101
      %2103 = vdwg.mxu0
      %2104 = vmatpush.msra.mxu0 0.0
      %2105 = vmatpush.msra.mxu0 0.0
      %2106 = vmatpush.msra.mxu0 0.0
      %2107 = vmatpush.msra.mxu0 0.0
      %2108 = vmatpush.msra.mxu0 0.0
      %2109 = vmatpush.msra.mxu0 0.0
      %2110 = vmatpush.msra.mxu0 0.0
      %2111 = vmatpush.msra.mxu0 0.0
      %2112 = vmatpush.msra.mxu0 0.0
      %2113 = vmatpush.msra.mxu0 0.0
      %2114 = vmatpush.msra.mxu0 0.0
      %2115 = vmatpush.msra.mxu0 0.0
      %2116 = vmatpush.msra.mxu0 0.0
      %2117 = vmatpush.msra.mxu0 0.0
      %2118 = vmatpush.msra.mxu0 0.0
      %2119 = vmatpush.msra.mxu0 %v2079
      %2120 = vmatmul.f32.gmra.mxu0 %v2073
      %v2121 = vpop.f32.mrf.mxu0
      %v2122 = vadd.f32 0.0, %v2121
      %2123 = vdwg.mxu0
      %2124 = vmatpush.msra.mxu0 0.0
      %2125 = vmatpush.msra.mxu0 0.0
      %2126 = vmatpush.msra.mxu0 0.0
      %2127 = vmatpush.msra.mxu0 0.0
      %2128 = vmatpush.msra.mxu0 0.0
      %2129 = vmatpush.msra.mxu0 0.0
      %2130 = vmatpush.msra.mxu0 0.0
      %2131 = vmatpush.msra.mxu0 0.0
      %2132 = vmatpush.msra.mxu0 0.0
      %2133 = vmatpush.msra.mxu0 0.0
      %2134 = vmatpush.msra.mxu0 0.0
      %2135 = vmatpush.msra.mxu0 0.0
      %2136 = vmatpush.msra.mxu0 0.0
      %2137 = vmatpush.msra.mxu0 0.0
      %2138 = vmatpush.msra.mxu0 0.0
      %2139 = vmatpush.msra.mxu0 %v2082
      %2140 = vmatmul.f32.gmra.mxu0 %v2073
      %v2141 = vpop.f32.mrf.mxu0
      %v2142 = vadd.f32 0.0, %v2141
      %2143 = vdwg.mxu0
      %v2144 = vadd.f32 %v2052, %v2102
      %v2145 = vadd.f32 %v2053, %v2122
      %v2146 = vadd.f32 %v2054, %v2142
      %2147 = vrot.lane.b32.xlu0 %v1621, 113
      %v2148 = vpop.permute.xlu0 %2147
      %2149 = vrot.lane.b32.xlu0 %v1622, 113
      %v2150 = vpop.permute.xlu0 %2149
      %2151 = vrot.lane.b32.xlu0 %v1623, 113
      %v2152 = vpop.permute.xlu0 %2151
      %v2153 = vsel %vm1330, %v2148, %v2150
      %v2154 = vsel %vm1330, %v2150, %v2152
      %v2158 = vsel %vm1336, %v2152, 0.0
      %v2159 = vmul.f32 %v2153, %v806
      %v2160 = vmul.f32 %v2154, %v806
      %v2161 = vmul.f32 %v2158, %v807
      %s2162 = scalar_lea.vmem %s4, 24
      %v2163 = vld [vmem:[%s2162] sm:$0xf]
      %v2165 = vsel %vm824, %v2163, 0
      %v2168 = vsel %vm828, %v2159, 0
      %v2171 = vsel %vm828, %v2160, 0
      %v2174 = vsel %vm828, %v2161, 0
      %2176 = vmatpush.msra.mxu0 0.0
      %2177 = vmatpush.msra.mxu0 0.0
      %2178 = vmatpush.msra.mxu0 0.0
      %2179 = vmatpush.msra.mxu0 0.0
      %2180 = vmatpush.msra.mxu0 0.0
      %2181 = vmatpush.msra.mxu0 0.0
      %2182 = vmatpush.msra.mxu0 0.0
      %2183 = vmatpush.msra.mxu0 0.0
      %2184 = vmatpush.msra.mxu0 0.0
      %2185 = vmatpush.msra.mxu0 0.0
      %2186 = vmatpush.msra.mxu0 0.0
      %2187 = vmatpush.msra.mxu0 0.0
      %2188 = vmatpush.msra.mxu0 0.0
      %2189 = vmatpush.msra.mxu0 0.0
      %2190 = vmatpush.msra.mxu0 0.0
      %2191 = vmatpush.msra.mxu0 %v2168
      %2192 = vmatmul.f32.gmra.mxu0 %v2165
      %v2193 = vpop.f32.mrf.mxu0
      %v2194 = vadd.f32 0.0, %v2193
      %2195 = vdwg.mxu0
      %2196 = vmatpush.msra.mxu0 0.0
      %2197 = vmatpush.msra.mxu0 0.0
      %2198 = vmatpush.msra.mxu0 0.0
      %2199 = vmatpush.msra.mxu0 0.0
      %2200 = vmatpush.msra.mxu0 0.0
      %2201 = vmatpush.msra.mxu0 0.0
      %2202 = vmatpush.msra.mxu0 0.0
      %2203 = vmatpush.msra.mxu0 0.0
      %2204 = vmatpush.msra.mxu0 0.0
      %2205 = vmatpush.msra.mxu0 0.0
      %2206 = vmatpush.msra.mxu0 0.0
      %2207 = vmatpush.msra.mxu0 0.0
      %2208 = vmatpush.msra.mxu0 0.0
      %2209 = vmatpush.msra.mxu0 0.0
      %2210 = vmatpush.msra.mxu0 0.0
      %2211 = vmatpush.msra.mxu0 %v2171
      %2212 = vmatmul.f32.gmra.mxu0 %v2165
      %v2213 = vpop.f32.mrf.mxu0
      %v2214 = vadd.f32 0.0, %v2213
      %2215 = vdwg.mxu0
      %2216 = vmatpush.msra.mxu0 0.0
      %2217 = vmatpush.msra.mxu0 0.0
      %2218 = vmatpush.msra.mxu0 0.0
      %2219 = vmatpush.msra.mxu0 0.0
      %2220 = vmatpush.msra.mxu0 0.0
      %2221 = vmatpush.msra.mxu0 0.0
      %2222 = vmatpush.msra.mxu0 0.0
      %2223 = vmatpush.msra.mxu0 0.0
      %2224 = vmatpush.msra.mxu0 0.0
      %2225 = vmatpush.msra.mxu0 0.0
      %2226 = vmatpush.msra.mxu0 0.0
      %2227 = vmatpush.msra.mxu0 0.0
      %2228 = vmatpush.msra.mxu0 0.0
      %2229 = vmatpush.msra.mxu0 0.0
      %2230 = vmatpush.msra.mxu0 0.0
      %2231 = vmatpush.msra.mxu0 %v2174
      %2232 = vmatmul.f32.gmra.mxu0 %v2165
      %v2233 = vpop.f32.mrf.mxu0
      %v2234 = vadd.f32 0.0, %v2233
      %2235 = vdwg.mxu0
      %v2236 = vadd.f32 %v2144, %v2194
      %v2237 = vadd.f32 %v2145, %v2214
      %v2238 = vadd.f32 %v2146, %v2234
      %2239 = vrot.lane.b32.xlu0 %v1621, 112
      %v2240 = vpop.permute.xlu0 %2239
      %2241 = vrot.lane.b32.xlu0 %v1622, 112
      %v2242 = vpop.permute.xlu0 %2241
      %2243 = vrot.lane.b32.xlu0 %v1623, 112
      %v2244 = vpop.permute.xlu0 %2243
      %v2245 = vsel %vm591, %v2240, %v2242
      %v2246 = vsel %vm591, %v2242, %v2244
      %v2248 = vsel %vm583, %v2244, 0.0
      %s2249 = scalar_lea.vmem %s4, 28
      %v2250 = vld [vmem:[%s2249] sm:$0xf]
      %v2252 = vsel %vm824, %v2250, 0
      %v2254 = vsel %vm828, %v2245, 0
      %v2256 = vsel %vm828, %v2246, 0
      %v2259 = vsel %vm828, %v2248, 0
      %2261 = vmatpush.msra.mxu0 0.0
      %2262 = vmatpush.msra.mxu0 0.0
      %2263 = vmatpush.msra.mxu0 0.0
      %2264 = vmatpush.msra.mxu0 0.0
      %2265 = vmatpush.msra.mxu0 0.0
      %2266 = vmatpush.msra.mxu0 0.0
      %2267 = vmatpush.msra.mxu0 0.0
      %2268 = vmatpush.msra.mxu0 0.0
      %2269 = vmatpush.msra.mxu0 0.0
      %2270 = vmatpush.msra.mxu0 0.0
      %2271 = vmatpush.msra.mxu0 0.0
      %2272 = vmatpush.msra.mxu0 0.0
      %2273 = vmatpush.msra.mxu0 0.0
      %2274 = vmatpush.msra.mxu0 0.0
      %2275 = vmatpush.msra.mxu0 0.0
      %2276 = vmatpush.msra.mxu0 %v2254
      %2277 = vmatmul.f32.gmra.mxu0 %v2252
      %v2278 = vpop.f32.mrf.mxu0
      %v2279 = vadd.f32 0.0, %v2278
      %2280 = vdwg.mxu0
      %2281 = vmatpush.msra.mxu0 0.0
      %2282 = vmatpush.msra.mxu0 0.0
      %2283 = vmatpush.msra.mxu0 0.0
      %2284 = vmatpush.msra.mxu0 0.0
      %2285 = vmatpush.msra.mxu0 0.0
      %2286 = vmatpush.msra.mxu0 0.0
      %2287 = vmatpush.msra.mxu0 0.0
      %2288 = vmatpush.msra.mxu0 0.0
      %2289 = vmatpush.msra.mxu0 0.0
      %2290 = vmatpush.msra.mxu0 0.0
      %2291 = vmatpush.msra.mxu0 0.0
      %2292 = vmatpush.msra.mxu0 0.0
      %2293 = vmatpush.msra.mxu0 0.0
      %2294 = vmatpush.msra.mxu0 0.0
      %2295 = vmatpush.msra.mxu0 0.0
      %2296 = vmatpush.msra.mxu0 %v2256
      %2297 = vmatmul.f32.gmra.mxu0 %v2252
      %v2298 = vpop.f32.mrf.mxu0
      %v2299 = vadd.f32 0.0, %v2298
      %2300 = vdwg.mxu0
      %2301 = vmatpush.msra.mxu0 0.0
      %2302 = vmatpush.msra.mxu0 0.0
      %2303 = vmatpush.msra.mxu0 0.0
      %2304 = vmatpush.msra.mxu0 0.0
      %2305 = vmatpush.msra.mxu0 0.0
      %2306 = vmatpush.msra.mxu0 0.0
      %2307 = vmatpush.msra.mxu0 0.0
      %2308 = vmatpush.msra.mxu0 0.0
      %2309 = vmatpush.msra.mxu0 0.0
      %2310 = vmatpush.msra.mxu0 0.0
      %2311 = vmatpush.msra.mxu0 0.0
      %2312 = vmatpush.msra.mxu0 0.0
      %2313 = vmatpush.msra.mxu0 0.0
      %2314 = vmatpush.msra.mxu0 0.0
      %2315 = vmatpush.msra.mxu0 0.0
      %2316 = vmatpush.msra.mxu0 %v2259
      %2317 = vmatmul.f32.gmra.mxu0 %v2252
      %v2318 = vpop.f32.mrf.mxu0
      %v2319 = vadd.f32 0.0, %v2318
      %2320 = vdwg.mxu0
      %v2321 = vadd.f32 %v2236, %v2279
      %v2322 = vadd.f32 %v2237, %v2299
      %v2323 = vadd.f32 %v2238, %v2319
      %2324 = vrot.lane.b32.xlu0 %v1621, 111
      %v2325 = vpop.permute.xlu0 %2324
      %2326 = vrot.lane.b32.xlu0 %v1622, 111
      %v2327 = vpop.permute.xlu0 %2326
      %2328 = vrot.lane.b32.xlu0 %v1623, 111
      %v2329 = vpop.permute.xlu0 %2328
      %v2330 = vsel %vm1509, %v2325, %v2327
      %v2331 = vsel %vm1509, %v2327, %v2329
      %v2335 = vsel %vm1515, %v2329, 0.0
      %v2336 = vmul.f32 %v2330, %v981
      %v2337 = vmul.f32 %v2331, %v981
      %v2338 = vmul.f32 %v2335, %v982
      %s2339 = scalar_lea.vmem %s4, 32
      %v2340 = vld [vmem:[%s2339] sm:$0xf]
      %v2342 = vsel %vm824, %v2340, 0
      %v2345 = vsel %vm828, %v2336, 0
      %v2348 = vsel %vm828, %v2337, 0
      %v2351 = vsel %vm828, %v2338, 0
      %2353 = vmatpush.msra.mxu0 0.0
      %2354 = vmatpush.msra.mxu0 0.0
      %2355 = vmatpush.msra.mxu0 0.0
      %2356 = vmatpush.msra.mxu0 0.0
      %2357 = vmatpush.msra.mxu0 0.0
      %2358 = vmatpush.msra.mxu0 0.0
      %2359 = vmatpush.msra.mxu0 0.0
      %2360 = vmatpush.msra.mxu0 0.0
      %2361 = vmatpush.msra.mxu0 0.0
      %2362 = vmatpush.msra.mxu0 0.0
      %2363 = vmatpush.msra.mxu0 0.0
      %2364 = vmatpush.msra.mxu0 0.0
      %2365 = vmatpush.msra.mxu0 0.0
      %2366 = vmatpush.msra.mxu0 0.0
      %2367 = vmatpush.msra.mxu0 0.0
      %2368 = vmatpush.msra.mxu0 %v2345
      %2369 = vmatmul.f32.gmra.mxu0 %v2342
      %v2370 = vpop.f32.mrf.mxu0
      %v2371 = vadd.f32 0.0, %v2370
      %2372 = vdwg.mxu0
      %2373 = vmatpush.msra.mxu0 0.0
      %2374 = vmatpush.msra.mxu0 0.0
      %2375 = vmatpush.msra.mxu0 0.0
      %2376 = vmatpush.msra.mxu0 0.0
      %2377 = vmatpush.msra.mxu0 0.0
      %2378 = vmatpush.msra.mxu0 0.0
      %2379 = vmatpush.msra.mxu0 0.0
      %2380 = vmatpush.msra.mxu0 0.0
      %2381 = vmatpush.msra.mxu0 0.0
      %2382 = vmatpush.msra.mxu0 0.0
      %2383 = vmatpush.msra.mxu0 0.0
      %2384 = vmatpush.msra.mxu0 0.0
      %2385 = vmatpush.msra.mxu0 0.0
      %2386 = vmatpush.msra.mxu0 0.0
      %2387 = vmatpush.msra.mxu0 0.0
      %2388 = vmatpush.msra.mxu0 %v2348
      %2389 = vmatmul.f32.gmra.mxu0 %v2342
      %v2390 = vpop.f32.mrf.mxu0
      %v2391 = vadd.f32 0.0, %v2390
      %2392 = vdwg.mxu0
      %2393 = vmatpush.msra.mxu0 0.0
      %2394 = vmatpush.msra.mxu0 0.0
      %2395 = vmatpush.msra.mxu0 0.0
      %2396 = vmatpush.msra.mxu0 0.0
      %2397 = vmatpush.msra.mxu0 0.0
      %2398 = vmatpush.msra.mxu0 0.0
      %2399 = vmatpush.msra.mxu0 0.0
      %2400 = vmatpush.msra.mxu0 0.0
      %2401 = vmatpush.msra.mxu0 0.0
      %2402 = vmatpush.msra.mxu0 0.0
      %2403 = vmatpush.msra.mxu0 0.0
      %2404 = vmatpush.msra.mxu0 0.0
      %2405 = vmatpush.msra.mxu0 0.0
      %2406 = vmatpush.msra.mxu0 0.0
      %2407 = vmatpush.msra.mxu0 0.0
      %2408 = vmatpush.msra.mxu0 %v2351
      %2409 = vmatmul.f32.gmra.mxu0 %v2342
      %v2410 = vpop.f32.mrf.mxu0
      %v2411 = vadd.f32 0.0, %v2410
      %2412 = vdwg.mxu0
      %v2413 = vadd.f32 %v2321, %v2371
      %v2414 = vadd.f32 %v2322, %v2391
      %v2415 = vadd.f32 %v2323, %v2411
      %v2416 = vld [vmem:[%s7] sm:$0xf]
      %2418 = vset.pattern.permute.xlu0 0
      %2419 = vperm.xlu0 %2418, %v2416
      %v2420 = vpop.permute.xlu0 %2419
      %v2422 = vmul.f32 %v2413, %v2420
      %v2423 = vmul.f32 %v2414, %v2420
      %v2424 = vmul.f32 %v2415, %v2420
      %v2425 = vld [vmem:[%s8] sm:$0xf]
      %2427 = vset.pattern.permute.xlu0 0
      %2428 = vperm.xlu0 %2427, %v2425
      %v2429 = vpop.permute.xlu0 %2428
      %v2431 = vadd.f32 %v2422, %v2429
      %v2432 = vadd.f32 %v2423, %v2429
      %v2433 = vadd.f32 %v2424, %v2429
      %2434 = vst [vmem:[#allocation1] ss:$2 sm:$0xff] %v496
      %v2435 = vld.sshfl [vmem:[#allocation1] sm:$0xff pattern:$0x75316420]
      %v2436 = vld.sshfl [vmem:[#allocation1 + $0x8] sm:$0xff pattern:$0x75316420]
      %2437 = vrot.lane.b32.xlu0 %v2435, 32
      %v2438 = vpop.permute.xlu0 %2437
      %2439 = vrot.lane.b32.xlu0 %v2436, 32
      %v2440 = vpop.permute.xlu0 %2439
      %v2441 = vsel %vm515, %v2438, %v2440
      %v2445 = vadd.f32 %v2431, %v2438
      %v2446 = vadd.f32 %v2432, %v2441
      %v2447 = vadd.f32 %v2433, %v2440
      %v2448 = vmax.f32 %v2445, 0.0
      %v2449 = vmax.f32 %v2446, 0.0
      %v2450 = vmax.f32 %v2447, 0.0
      %v2454 = vrot.slane %v2449, 4
      %v2455 = vsel %vm828, %v2448, %v2454
      %2456 = vrot.lane.b32.xlu0 %v2455, 96
      %v2457 = vpop.permute.xlu0 %2456
      %2458 = vrot.lane.b32.xlu0 %v2450, 96
      %v2459 = vpop.permute.xlu0 %2458
      %v2460 = vrot.slane %v2457, 4
      %v2461 = vrot.slane %v2459, 4
      %v2462 = vsel %vm828, %v2460, %v2461
      %v2463 = vsel %vm589, %v2457, %v2462
      %2465 = vst [vmem:[%s488] sm:$0xff] %v2463
      %s2466 = smul.u32 2, %s25
      %p2467 = scmp.lt.s32.totalorder %s24, 1
      %s2468 = scalar_select %p2467, %s24, 1
      %p2469 = scmp.lt.s32.totalorder %s2466, 1
      %s2470 = scalar_select %p2469, %s2466, 1
      %s2471 = smul.addr %s2468, 2
      %s2472 = sadd.s32 %s2470, %s2471
      %s2473 = smul.addr %s2472, 4
      %s2474 = scalar_lea.vmem %s9, %s2473
      // Predicated region
      $region57: #{residual_block_nchw.1} parent=55 // pred_check
        %p2475 = pneg %p278
      $region58: #{residual_block_nchw.1} parent=55 // pred_check_branch
        %2477 = sbr.rel (%p2475) target = $region60
      $region59: #{residual_block_nchw.1} parent=55 // pred_region
        %s2478 = smul.u32 2, %s25
      $region60: #{residual_block_nchw.1} parent=55 // pred_fallthru
        _
    $region56: #{residual_block_nchw.1} parent=5 // pred_fallthru
      _
    %p2479 = scmp.le.s32.totalorder 2, %s15
    // Predicated region
    $region61: #{residual_block_nchw.1} parent=5 // pred_check
      %p2480 = pneg %p2479
    $region62: #{residual_block_nchw.1} parent=5 // pred_check_branch
      %2482 = sbr.rel (%p2480) target = $region64
    $region63: #{residual_block_nchw.1} parent=5 // pred_region
      %s2483 = ssub.s32 %s15, 2
      // Predicated region
      $region65: #{residual_block_nchw.1} parent=63 // pred_check
        %p2484 = pneg %p284
      $region66: #{residual_block_nchw.1} parent=63 // pred_check_branch
        %2486 = sbr.rel (%p2484) target = $region68
      $region67: #{residual_block_nchw.1} parent=63 // pred_region
        %s2487 = smul.u32 2, %s27
        %p2488 = scmp.lt.s32.totalorder %s26, 1
        %s2489 = scalar_select %p2488, %s26, 1
        %p2490 = scmp.lt.s32.totalorder %s2487, 1
        %s2491 = scalar_select %p2490, %s2487, 1
        %s2492 = smul.addr %s2489, 2
        %s2493 = sadd.s32 %s2491, %s2492
        %s2494 = smul.addr %s2493, 4
        %s2495 = scalar_lea.vmem %s9, %s2494
      $region68: #{residual_block_nchw.1} parent=63 // pred_fallthru
        _
    $region64: #{residual_block_nchw.1} parent=5 // pred_fallthru
      _
  $region6: #{residual_block_nchw.1} parent=0 // loop_footer
    %s19 = sadd.s32 1, %s15
  $region7: #{residual_block_nchw.1} parent=0 // loop_footer_branch
    %14 = sbr.rel target = $region3
  $region8: #{residual_block_nchw.1} parent=0 // loop_exit
    _

</llo_original>
